<compile_context>
chip_gen: v7x
topology: tpu7x:2x2x1
jax: 0.10.0
libtpu: 0.0.40
codegen_flags: <defaults>
</compile_context>

<pallas_src>
import functools

import jax
import jax.numpy as jnp
from jax.experimental import pallas as pl
from jax.experimental.pallas import tpu as pltpu


def _round_up(x: int, m: int) -> int:
    return (x + m - 1) // m * m


def _pick_tile(dim: int, candidates) -> int:
    for c in candidates:
        if dim % c == 0:
            return c
    return 128


def _vmem_capacity_bytes() -> int:
    try:
        return int(pltpu.get_tpu_info().vmem_capacity_bytes)
    except Exception:
        return 64 << 20  # conservative default (v7x per-TensorCore VMEM)


# ----------------------------- fused (weight-resident) path -----------------------------

def _mlp_kernel(x_ref, *refs, n_layers: int):
    """Fused MLP on one batch tile.

    refs = (w0, b0, w1, b1, ..., w_{L-1}, b_{L-1}, o_ref).
    Weights bf16 (in_pad, out_pad), biases f32 (1, out_pad); accumulation in f32.
    Intermediate activations live in vregs / compiler-managed VMEM scratch.
    """
    o_ref = refs[-1]
    h = x_ref[...]                                   # bf16 (tm, in_pad)
    for li in range(n_layers):
        w = refs[2 * li][...]
        b = refs[2 * li + 1][...]
        y = jnp.dot(h, w, preferred_element_type=jnp.float32) + b
        if li < n_layers - 1:
            h = jnp.maximum(y, 0.0).astype(w.dtype)  # ReLU in f32, bf16 for next MXU pass
        else:
            h = y                                    # final layer: no activation
    o_ref[...] = h.astype(o_ref.dtype)               # bf16 lane-dense store


def _fused_vmem_budget_bytes(pdims, tm):
    n_layers = len(pdims) - 1
    w_bytes = sum(pdims[i] * pdims[i + 1] for i in range(n_layers)) * 2  # bf16, 1 buffer
    b_bytes = sum(pdims[1:]) * 4                                         # f32 biases
    x_bytes = 2 * tm * pdims[0] * 2                                      # dbl-buffered in tile
    o_bytes = 2 * tm * pdims[-1] * 2                                     # dbl-buffered out tile
    act_bytes = 3 * tm * max(pdims) * 4                                  # live f32 activations
    return w_bytes + b_bytes + x_bytes + o_bytes + act_bytes


def _fused_forward(xp, flat_params, pdims, tm, vmem_limit, out_dtype, buffered_one):
    Bp = xp.shape[0]
    n_layers = len(flat_params) // 2

    def resident_spec(shape):
        if buffered_one:
            # Constant block index -> DMA'd once; Buffered(1) keeps a single VMEM copy
            # instead of the default double-buffer (halves resident-weight VMEM).
            return pl.BlockSpec(shape, lambda i: (0, 0), pipeline_mode=pl.Buffered(1))
        return pl.BlockSpec(shape, lambda i: (0, 0))

    in_specs = [pl.BlockSpec((tm, pdims[0]), lambda i: (i, 0))]
    for p in flat_params:
        in_specs.append(resident_spec(p.shape))
    out_specs = pl.BlockSpec((tm, pdims[-1]), lambda i: (i, 0))

    flops = 2 * Bp * sum(pdims[i] * pdims[i + 1] for i in range(n_layers))
    bytes_accessed = (Bp * pdims[0] * 2 + Bp * pdims[-1] * 2
                      + sum(pdims[i] * pdims[i + 1] for i in range(n_layers)) * 2
                      + sum(pdims[1:]) * 4)

    return pl.pallas_call(
        functools.partial(_mlp_kernel, n_layers=n_layers),
        out_shape=jax.ShapeDtypeStruct((Bp, pdims[-1]), out_dtype),
        grid_spec=pl.GridSpec(grid=(Bp // tm,), in_specs=in_specs, out_specs=out_specs),
        compiler_params=pltpu.CompilerParams(
            dimension_semantics=("parallel",),       # batch axis -> megacore on v7x
            vmem_limit_bytes=vmem_limit),
        cost_estimate=pl.CostEstimate(flops=flops, transcendentals=0,
                                      bytes_accessed=bytes_accessed),
    )(xp, *flat_params)


# --------------------- streamed fallback (weights do not fit VMEM) ----------------------

def _linear_kernel(x_ref, w_ref, b_ref, o_ref, acc_ref, *, apply_relu):
    @pl.when(pl.program_id(2) == 0)
    def _():
        acc_ref[...] = jnp.zeros_like(acc_ref)

    acc_ref[...] += jnp.dot(x_ref[...], w_ref[...], preferred_element_type=jnp.float32)

    @pl.when(pl.program_id(2) == pl.num_programs(2) - 1)
    def _():
        y = acc_ref[...] + b_ref[...]
        if apply_relu:
            y = jnp.maximum(y, 0.0)
        o_ref[...] = y.astype(o_ref.dtype)


def _linear_streamed(x, w, b, *, apply_relu, tm, out_dtype):
    M, K = x.shape
    _, N = w.shape
    tk = _pick_tile(K, (512, 256, 128))
    tn = _pick_tile(N, (256, 128))
    return pl.pallas_call(
        functools.partial(_linear_kernel, apply_relu=apply_relu),
        out_shape=jax.ShapeDtypeStruct((M, N), out_dtype),
        grid_spec=pltpu.PrefetchScalarGridSpec(
            num_scalar_prefetch=0,
            grid=(M // tm, N // tn, K // tk),
            in_specs=[pl.BlockSpec((tm, tk), lambda i, j, k: (i, k)),
                      pl.BlockSpec((tk, tn), lambda i, j, k: (k, j)),
                      pl.BlockSpec((1, tn), lambda i, j, k: (0, j))],
            out_specs=pl.BlockSpec((tm, tn), lambda i, j, k: (i, j)),
            scratch_shapes=[pltpu.VMEM((tm, tn), jnp.float32)]),
        compiler_params=pltpu.CompilerParams(
            dimension_semantics=("parallel", "parallel", "arbitrary")),
    )(x, w, b)


# ---------------------------------- public wrappers -------------------------------------

def prepare_params(params, input_size, compute_dtype=jnp.bfloat16):
    """Pad feature dims to 128 lanes and cast weights to bf16 ONCE (hoisted out of the
    per-call path). params: list of (w, b) with w: (in, out) f32, b: (1, out) f32, so
    the math is y = x @ w + b (transposed relative to PyTorch's (out, in) storage)."""
    dims = [input_size] + [w.shape[1] for (w, _) in params]
    pdims = [_round_up(d, 128) for d in dims]
    flat = []
    for li, (w, b) in enumerate(params):
        wp = (jnp.zeros((pdims[li], pdims[li + 1]), compute_dtype)
              .at[: w.shape[0], : w.shape[1]].set(w.astype(compute_dtype)))
        bp = (jnp.zeros((1, pdims[li + 1]), jnp.float32)
              .at[:, : b.shape[1]].set(b.astype(jnp.float32)))
        flat += [wp, bp]
    return {"flat": flat, "pdims": pdims, "dims": dims,
            "compute_dtype": compute_dtype, "out_true": dims[-1]}


def mlp_pallas(x, prepared, *, tm_max: int = 256, force_streaming: bool = False):
    """Fused MLP forward: y = W_L(...ReLU(W_1 x + b_1)...) + b_L."""
    B, K = x.shape
    pdims = prepared["pdims"]
    flat = prepared["flat"]
    cdt = prepared["compute_dtype"]
    n_layers = len(flat) // 2
    assert K == prepared["dims"][0]

    # Adaptive batch tile: bounded padding (<= 7 rows); >=2 grid steps for big batches
    # so the "parallel" axis can shard across v7x's two TensorCores.
    n_tiles = max(1, -(-B // tm_max))
    if n_tiles == 1 and B >= 256:
        n_tiles = 2
    tm = _round_up(-(-B // n_tiles), 8)
    Bp = n_tiles * tm

    xp = jnp.zeros((Bp, pdims[0]), cdt).at[:B, :K].set(x.astype(cdt))

    vmem_cap = _vmem_capacity_bytes()
    budget = _fused_vmem_budget_bytes(pdims, tm)
    fused_fits = budget <= int(0.8 * vmem_cap)
    vmem_limit = min(int(0.9 * vmem_cap), max(32 << 20, int(1.2 * budget)))

    out_p = None
    if fused_fits and not force_streaming:
        # Prefer single-buffered resident weights; retry with default buffering if the
        # installed jax/Mosaic rejects pipeline_mode=Buffered(1).
        for buffered_one in (True, False):
            try:
                out_p = _fused_forward(xp, flat, pdims, tm, vmem_limit, cdt, buffered_one)
                break
            except Exception:
                out_p = None

    if out_p is None:
        # Fallback: weights exceed the VMEM budget (or fused lowering failed) ->
        # per-layer K/N-tiled streaming matmuls. Intermediates are bf16 in HBM.
        h = xp
        for li in range(n_layers):
            h = _linear_streamed(h, flat[2 * li], flat[2 * li + 1],
                                 apply_relu=(li < n_layers - 1), tm=tm, out_dtype=cdt)
        out_p = h

    return out_p[:B, : prepared["out_true"]].astype(jnp.float32)


def init_params(key, input_size, output_size, neurons, hidden_layers):
    """Deterministic synthetic parameters matching the module's layer shapes.
    Weights stored as (in_features, out_features) so y = x @ W + b."""
    dims = [input_size] + [neurons] * hidden_layers + [output_size]
    params = []
    for li in range(len(dims) - 1):
        fan_in, fan_out = dims[li], dims[li + 1]
        key, kw, kb = jax.random.split(key, 3)
        bound = 1.0 / jnp.sqrt(fan_in)
        w = jax.random.uniform(kw, (fan_in, fan_out), jnp.float32, -bound, bound)
        b = jax.random.uniform(kb, (1, fan_out), jnp.float32, -bound, bound)
        params.append((w, b))
    return params


if __name__ == "__main__":
    # Small, module-consistent shapes.
    batch = 8
    input_size = 32
    neurons = 32
    hidden_layers = 2
    output_size = 8

    key = jax.random.PRNGKey(0)
    key, kx = jax.random.split(key)
    x = jax.random.normal(kx, (batch, input_size), jnp.float32)
    params = init_params(key, input_size, output_size, neurons, hidden_layers)

    prepared = prepare_params(params, input_size)     # padding/casting hoisted: done once

    out = mlp_pallas(x, prepared)                     # fused, weight-resident path
    jax.block_until_ready(out)
    assert out.shape == (batch, output_size)

    # Also exercise the streamed fallback (used when weights exceed the VMEM budget).
    out_stream = mlp_pallas(x, prepared, force_streaming=True)
    jax.block_until_ready(out_stream)

    # Pure-JAX reference with matching numerics (bf16 in/weights, f32 acc, bf16 output).
    ref = x.astype(jnp.bfloat16)
    for li, (w, b) in enumerate(params):
        ref = jnp.dot(ref, w.astype(jnp.bfloat16), preferred_element_type=jnp.float32) + b
        if li < len(params) - 1:
            ref = jnp.maximum(ref, 0.0).astype(jnp.bfloat16)
    ref = ref.astype(jnp.bfloat16).astype(jnp.float32)

    assert jnp.allclose(out, ref, atol=2e-2, rtol=2e-2), (
        f"fused max abs err = {jnp.max(jnp.abs(out - ref))}")
    assert jnp.allclose(out_stream, ref, atol=2e-2, rtol=2e-2), (
        f"streamed max abs err = {jnp.max(jnp.abs(out_stream - ref))}")

    print("KERNEL_OK")
</pallas_src>

<mosaic_0001>
module attributes {stable_mosaic.version = 11 : i64} {
  func.func @_mlp_kernel(%arg0: i32, %arg1: memref<8x128xbf16, #tpu.memory_space<vmem>>, %arg2: memref<128x128xbf16, #tpu.memory_space<vmem>>, %arg3: memref<1x128xf32, #tpu.memory_space<vmem>>, %arg4: memref<128x128xbf16, #tpu.memory_space<vmem>>, %arg5: memref<1x128xf32, #tpu.memory_space<vmem>>, %arg6: memref<128x128xbf16, #tpu.memory_space<vmem>>, %arg7: memref<1x128xf32, #tpu.memory_space<vmem>>, %arg8: memref<8x128xbf16, #tpu.memory_space<vmem>>) attributes {dimension_semantics = [#tpu.dimension_semantics<parallel>], iteration_bounds = array<i64: 1>, scalar_prefetch = 0 : i64, scratch_operands = 0 : i64, tpu.core_type = #tpu.core_type<tc>, window_params = [{transform_indices = @transform_0, window_bounds = array<i64: 8, 128>}, {pipeline_mode = #tpu.pipeline_mode<synchronous>, transform_indices = @transform_1, window_bounds = array<i64: 128, 128>}, {pipeline_mode = #tpu.pipeline_mode<synchronous>, transform_indices = @transform_2, window_bounds = array<i64: 1, 128>}, {pipeline_mode = #tpu.pipeline_mode<synchronous>, transform_indices = @transform_3, window_bounds = array<i64: 128, 128>}, {pipeline_mode = #tpu.pipeline_mode<synchronous>, transform_indices = @transform_4, window_bounds = array<i64: 1, 128>}, {pipeline_mode = #tpu.pipeline_mode<synchronous>, transform_indices = @transform_5, window_bounds = array<i64: 128, 128>}, {pipeline_mode = #tpu.pipeline_mode<synchronous>, transform_indices = @transform_6, window_bounds = array<i64: 1, 128>}, {transform_indices = @transform_7, window_bounds = array<i64: 8, 128>}]} {
    %c0 = arith.constant 0 : index
    %c0_0 = arith.constant 0 : index
    %0 = vector.load %arg1[%c0, %c0_0] : memref<8x128xbf16, #tpu.memory_space<vmem>>, vector<8x128xbf16>
    %c0_1 = arith.constant 0 : index
    %c0_2 = arith.constant 0 : index
    %1 = vector.load %arg2[%c0_1, %c0_2] : memref<128x128xbf16, #tpu.memory_space<vmem>>, vector<128x128xbf16>
    %c0_3 = arith.constant 0 : index
    %c0_4 = arith.constant 0 : index
    %2 = vector.load %arg3[%c0_3, %c0_4] : memref<1x128xf32, #tpu.memory_space<vmem>>, vector<1x128xf32>
    %cst = arith.constant dense<0.000000e+00> : vector<8x128xf32>
    %3 = tpu.matmul %0, %1, %cst {dimension_numbers = #tpu.dot_dimension_numbers<[1], [0], [0], [1], [0, 0, 1, 1], [], []>} : vector<8x128xbf16>, vector<128x128xbf16>, vector<8x128xf32> -> vector<8x128xf32>
    %4 = vector.broadcast %2 : vector<1x128xf32> to vector<8x128xf32>
    %5 = arith.addf %3, %4 : vector<8x128xf32>
    %cst_5 = arith.constant 0.000000e+00 : f32
    %6 = vector.broadcast %cst_5 : f32 to vector<8x128xf32>
    %7 = arith.maximumf %5, %6 : vector<8x128xf32>
    %8 = arith.truncf %7 : vector<8x128xf32> to vector<8x128xbf16>
    %c0_6 = arith.constant 0 : index
    %c0_7 = arith.constant 0 : index
    %9 = vector.load %arg4[%c0_6, %c0_7] : memref<128x128xbf16, #tpu.memory_space<vmem>>, vector<128x128xbf16>
    %c0_8 = arith.constant 0 : index
    %c0_9 = arith.constant 0 : index
    %10 = vector.load %arg5[%c0_8, %c0_9] : memref<1x128xf32, #tpu.memory_space<vmem>>, vector<1x128xf32>
    %cst_10 = arith.constant dense<0.000000e+00> : vector<8x128xf32>
    %11 = tpu.matmul %8, %9, %cst_10 {dimension_numbers = #tpu.dot_dimension_numbers<[1], [0], [0], [1], [0, 0, 1, 1], [], []>} : vector<8x128xbf16>, vector<128x128xbf16>, vector<8x128xf32> -> vector<8x128xf32>
    %12 = vector.broadcast %10 : vector<1x128xf32> to vector<8x128xf32>
    %13 = arith.addf %11, %12 : vector<8x128xf32>
    %cst_11 = arith.constant 0.000000e+00 : f32
    %14 = vector.broadcast %cst_11 : f32 to vector<8x128xf32>
    %15 = arith.maximumf %13, %14 : vector<8x128xf32>
    %16 = arith.truncf %15 : vector<8x128xf32> to vector<8x128xbf16>
    %c0_12 = arith.constant 0 : index
    %c0_13 = arith.constant 0 : index
    %17 = vector.load %arg6[%c0_12, %c0_13] : memref<128x128xbf16, #tpu.memory_space<vmem>>, vector<128x128xbf16>
    %c0_14 = arith.constant 0 : index
    %c0_15 = arith.constant 0 : index
    %18 = vector.load %arg7[%c0_14, %c0_15] : memref<1x128xf32, #tpu.memory_space<vmem>>, vector<1x128xf32>
    %cst_16 = arith.constant dense<0.000000e+00> : vector<8x128xf32>
    %19 = tpu.matmul %16, %17, %cst_16 {dimension_numbers = #tpu.dot_dimension_numbers<[1], [0], [0], [1], [0, 0, 1, 1], [], []>} : vector<8x128xbf16>, vector<128x128xbf16>, vector<8x128xf32> -> vector<8x128xf32>
    %20 = vector.broadcast %18 : vector<1x128xf32> to vector<8x128xf32>
    %21 = arith.addf %19, %20 : vector<8x128xf32>
    %22 = arith.truncf %21 : vector<8x128xf32> to vector<8x128xbf16>
    %c0_17 = arith.constant 0 : index
    %c0_18 = arith.constant 0 : index
    %23 = vector.load %arg8[%c0_17, %c0_18] : memref<8x128xbf16, #tpu.memory_space<vmem>>, vector<8x128xbf16>
    tpu.vector_store %arg8[%c0_17, %c0_18], %22 {strides = array<i32>} : memref<8x128xbf16, #tpu.memory_space<vmem>>, vector<8x128xbf16>,
    return
  }
  func.func @transform_0(%arg0: i32) -> (i32, i32) {
    %c0_i32 = arith.constant 0 : i32
    %c0_i32_0 = arith.constant 0 : i32
    return %arg0, %c0_i32 : i32, i32
  }
  func.func @transform_1(%arg0: i32) -> (i32, i32) {
    %c0_i32 = arith.constant 0 : i32
    %c0_i32_0 = arith.constant 0 : i32
    %c0_i32_1 = arith.constant 0 : i32
    return %c0_i32, %c0_i32_0 : i32, i32
  }
  func.func @transform_2(%arg0: i32) -> (i32, i32) {
    %c0_i32 = arith.constant 0 : i32
    %c0_i32_0 = arith.constant 0 : i32
    %c0_i32_1 = arith.constant 0 : i32
    return %c0_i32, %c0_i32_0 : i32, i32
  }
  func.func @transform_3(%arg0: i32) -> (i32, i32) {
    %c0_i32 = arith.constant 0 : i32
    %c0_i32_0 = arith.constant 0 : i32
    %c0_i32_1 = arith.constant 0 : i32
    return %c0_i32, %c0_i32_0 : i32, i32
  }
  func.func @transform_4(%arg0: i32) -> (i32, i32) {
    %c0_i32 = arith.constant 0 : i32
    %c0_i32_0 = arith.constant 0 : i32
    %c0_i32_1 = arith.constant 0 : i32
    return %c0_i32, %c0_i32_0 : i32, i32
  }
  func.func @transform_5(%arg0: i32) -> (i32, i32) {
    %c0_i32 = arith.constant 0 : i32
    %c0_i32_0 = arith.constant 0 : i32
    %c0_i32_1 = arith.constant 0 : i32
    return %c0_i32, %c0_i32_0 : i32, i32
  }
  func.func @transform_6(%arg0: i32) -> (i32, i32) {
    %c0_i32 = arith.constant 0 : i32
    %c0_i32_0 = arith.constant 0 : i32
    %c0_i32_1 = arith.constant 0 : i32
    return %c0_i32, %c0_i32_0 : i32, i32
  }
  func.func @transform_7(%arg0: i32) -> (i32, i32) {
    %c0_i32 = arith.constant 0 : i32
    %c0_i32_0 = arith.constant 0 : i32
    return %arg0, %c0_i32 : i32, i32
  }
}

module attributes {stable_mosaic.version = 11 : i64} {
  func.func @_mlp_kernel(%arg0: i32, %arg1: memref<8x128xbf16, #tpu.memory_space<vmem>>, %arg2: memref<128x128xbf16, #tpu.memory_space<vmem>>, %arg3: memref<1x128xf32, #tpu.memory_space<vmem>>, %arg4: memref<128x128xbf16, #tpu.memory_space<vmem>>, %arg5: memref<1x128xf32, #tpu.memory_space<vmem>>, %arg6: memref<128x128xbf16, #tpu.memory_space<vmem>>, %arg7: memref<1x128xf32, #tpu.memory_space<vmem>>, %arg8: memref<8x128xbf16, #tpu.memory_space<vmem>>) attributes {dimension_semantics = [#tpu.dimension_semantics<parallel>], iteration_bounds = array<i64: 1>, scalar_prefetch = 0 : i64, scratch_operands = 0 : i64, tpu.core_type = #tpu.core_type<tc>, window_params = [{transform_indices = @transform_0, window_bounds = array<i64: 8, 128>}, {pipeline_mode = #tpu.pipeline_mode<synchronous>, transform_indices = @transform_1, window_bounds = array<i64: 128, 128>}, {pipeline_mode = #tpu.pipeline_mode<synchronous>, transform_indices = @transform_2, window_bounds = array<i64: 1, 128>}, {pipeline_mode = #tpu.pipeline_mode<synchronous>, transform_indices = @transform_3, window_bounds = array<i64: 128, 128>}, {pipeline_mode = #tpu.pipeline_mode<synchronous>, transform_indices = @transform_4, window_bounds = array<i64: 1, 128>}, {pipeline_mode = #tpu.pipeline_mode<synchronous>, transform_indices = @transform_5, window_bounds = array<i64: 128, 128>}, {pipeline_mode = #tpu.pipeline_mode<synchronous>, transform_indices = @transform_6, window_bounds = array<i64: 1, 128>}, {transform_indices = @transform_7, window_bounds = array<i64: 8, 128>}]} {
    %c0 = arith.constant 0 : index
    %c0_0 = arith.constant 0 : index
    %0 = vector.load %arg1[%c0, %c0_0] : memref<8x128xbf16, #tpu.memory_space<vmem>>, vector<8x128xbf16>
    %c0_1 = arith.constant 0 : index
    %c0_2 = arith.constant 0 : index
    %1 = vector.load %arg2[%c0_1, %c0_2] : memref<128x128xbf16, #tpu.memory_space<vmem>>, vector<128x128xbf16>
    %c0_3 = arith.constant 0 : index
    %c0_4 = arith.constant 0 : index
    %2 = vector.load %arg3[%c0_3, %c0_4] : memref<1x128xf32, #tpu.memory_space<vmem>>, vector<1x128xf32>
    %cst = arith.constant dense<0.000000e+00> : vector<8x128xf32>
    %3 = tpu.matmul %0, %1, %cst {dimension_numbers = #tpu.dot_dimension_numbers<[1], [0], [0], [1], [0, 0, 1, 1], [], []>} : vector<8x128xbf16>, vector<128x128xbf16>, vector<8x128xf32> -> vector<8x128xf32>
    %4 = vector.broadcast %2 : vector<1x128xf32> to vector<8x128xf32>
    %5 = arith.addf %3, %4 : vector<8x128xf32>
    %cst_5 = arith.constant 0.000000e+00 : f32
    %6 = vector.broadcast %cst_5 : f32 to vector<8x128xf32>
    %7 = arith.maximumf %5, %6 : vector<8x128xf32>
    %8 = arith.truncf %7 : vector<8x128xf32> to vector<8x128xbf16>
    %c0_6 = arith.constant 0 : index
    %c0_7 = arith.constant 0 : index
    %9 = vector.load %arg4[%c0_6, %c0_7] : memref<128x128xbf16, #tpu.memory_space<vmem>>, vector<128x128xbf16>
    %c0_8 = arith.constant 0 : index
    %c0_9 = arith.constant 0 : index
    %10 = vector.load %arg5[%c0_8, %c0_9] : memref<1x128xf32, #tpu.memory_space<vmem>>, vector<1x128xf32>
    %cst_10 = arith.constant dense<0.000000e+00> : vector<8x128xf32>
    %11 = tpu.matmul %8, %9, %cst_10 {dimension_numbers = #tpu.dot_dimension_numbers<[1], [0], [0], [1], [0, 0, 1, 1], [], []>} : vector<8x128xbf16>, vector<128x128xbf16>, vector<8x128xf32> -> vector<8x128xf32>
    %12 = vector.broadcast %10 : vector<1x128xf32> to vector<8x128xf32>
    %13 = arith.addf %11, %12 : vector<8x128xf32>
    %cst_11 = arith.constant 0.000000e+00 : f32
    %14 = vector.broadcast %cst_11 : f32 to vector<8x128xf32>
    %15 = arith.maximumf %13, %14 : vector<8x128xf32>
    %16 = arith.truncf %15 : vector<8x128xf32> to vector<8x128xbf16>
    %c0_12 = arith.constant 0 : index
    %c0_13 = arith.constant 0 : index
    %17 = vector.load %arg6[%c0_12, %c0_13] : memref<128x128xbf16, #tpu.memory_space<vmem>>, vector<128x128xbf16>
    %c0_14 = arith.constant 0 : index
    %c0_15 = arith.constant 0 : index
    %18 = vector.load %arg7[%c0_14, %c0_15] : memref<1x128xf32, #tpu.memory_space<vmem>>, vector<1x128xf32>
    %cst_16 = arith.constant dense<0.000000e+00> : vector<8x128xf32>
    %19 = tpu.matmul %16, %17, %cst_16 {dimension_numbers = #tpu.dot_dimension_numbers<[1], [0], [0], [1], [0, 0, 1, 1], [], []>} : vector<8x128xbf16>, vector<128x128xbf16>, vector<8x128xf32> -> vector<8x128xf32>
    %20 = vector.broadcast %18 : vector<1x128xf32> to vector<8x128xf32>
    %21 = arith.addf %19, %20 : vector<8x128xf32>
    %22 = arith.truncf %21 : vector<8x128xf32> to vector<8x128xbf16>
    %c0_17 = arith.constant 0 : index
    %c0_18 = arith.constant 0 : index
    %23 = vector.load %arg8[%c0_17, %c0_18] : memref<8x128xbf16, #tpu.memory_space<vmem>>, vector<8x128xbf16>
    tpu.vector_store %arg8[%c0_17, %c0_18], %22 {strides = array<i32>} : memref<8x128xbf16, #tpu.memory_space<vmem>>, vector<8x128xbf16>,
    return
  }
  func.func @transform_0(%arg0: i32) -> (i32, i32) {
    %c0_i32 = arith.constant 0 : i32
    %c0_i32_0 = arith.constant 0 : i32
    return %arg0, %c0_i32 : i32, i32
  }
  func.func @transform_1(%arg0: i32) -> (i32, i32) {
    %c0_i32 = arith.constant 0 : i32
    %c0_i32_0 = arith.constant 0 : i32
    %c0_i32_1 = arith.constant 0 : i32
    return %c0_i32, %c0_i32_0 : i32, i32
  }
  func.func @transform_2(%arg0: i32) -> (i32, i32) {
    %c0_i32 = arith.constant 0 : i32
    %c0_i32_0 = arith.constant 0 : i32
    %c0_i32_1 = arith.constant 0 : i32
    return %c0_i32, %c0_i32_0 : i32, i32
  }
  func.func @transform_3(%arg0: i32) -> (i32, i32) {
    %c0_i32 = arith.constant 0 : i32
    %c0_i32_0 = arith.constant 0 : i32
    %c0_i32_1 = arith.constant 0 : i32
    return %c0_i32, %c0_i32_0 : i32, i32
  }
  func.func @transform_4(%arg0: i32) -> (i32, i32) {
    %c0_i32 = arith.constant 0 : i32
    %c0_i32_0 = arith.constant 0 : i32
    %c0_i32_1 = arith.constant 0 : i32
    return %c0_i32, %c0_i32_0 : i32, i32
  }
  func.func @transform_5(%arg0: i32) -> (i32, i32) {
    %c0_i32 = arith.constant 0 : i32
    %c0_i32_0 = arith.constant 0 : i32
    %c0_i32_1 = arith.constant 0 : i32
    return %c0_i32, %c0_i32_0 : i32, i32
  }
  func.func @transform_6(%arg0: i32) -> (i32, i32) {
    %c0_i32 = arith.constant 0 : i32
    %c0_i32_0 = arith.constant 0 : i32
    %c0_i32_1 = arith.constant 0 : i32
    return %c0_i32, %c0_i32_0 : i32, i32
  }
  func.func @transform_7(%arg0: i32) -> (i32, i32) {
    %c0_i32 = arith.constant 0 : i32
    %c0_i32_0 = arith.constant 0 : i32
    return %arg0, %c0_i32 : i32, i32
  }
}

module attributes {stable_mosaic.version = 11 : i64} {
  func.func @_linear_kernel(%arg0: i32, %arg1: i32, %arg2: i32, %arg3: memref<8x128xbf16, #tpu.memory_space<vmem>>, %arg4: memref<128x128xbf16, #tpu.memory_space<vmem>>, %arg5: memref<1x128xf32, #tpu.memory_space<vmem>>, %arg6: memref<8x128xbf16, #tpu.memory_space<vmem>>, %arg7: memref<8x128xf32, #tpu.memory_space<vmem>>) attributes {dimension_semantics = [#tpu.dimension_semantics<parallel>, #tpu.dimension_semantics<parallel>, #tpu.dimension_semantics<arbitrary>], iteration_bounds = array<i64: 1, 1, 1>, scalar_prefetch = 0 : i64, scratch_operands = 1 : i64, tpu.core_type = #tpu.core_type<tc>, window_params = [{transform_indices = @transform_0, window_bounds = array<i64: 8, 128>}, {transform_indices = @transform_1, window_bounds = array<i64: 128, 128>}, {transform_indices = @transform_2, window_bounds = array<i64: 1, 128>}, {transform_indices = @transform_3, window_bounds = array<i64: 8, 128>}]} {
    %c0_i32 = arith.constant 0 : i32
    %0 = arith.cmpi eq, %arg2, %c0_i32 : i32
    %1 = arith.extui %0 : i1 to i32
    %c0_i32_0 = arith.constant 0 : i32
    %2 = arith.cmpi ne, %1, %c0_i32_0 : i32
    scf.if %2 {
      %cst_10 = arith.constant 0.000000e+00 : f32
      %12 = vector.broadcast %cst_10 : f32 to vector<8x128xf32>
      %c0_11 = arith.constant 0 : index
      %c0_12 = arith.constant 0 : index
      %13 = vector.load %arg7[%c0_11, %c0_12] : memref<8x128xf32, #tpu.memory_space<vmem>>, vector<8x128xf32>
      tpu.vector_store %arg7[%c0_11, %c0_12], %12 {strides = array<i32>} : memref<8x128xf32, #tpu.memory_space<vmem>>, vector<8x128xf32>,
    } else {
    }
    %c0 = arith.constant 0 : index
    %c0_1 = arith.constant 0 : index
    %3 = vector.load %arg7[%c0, %c0_1] : memref<8x128xf32, #tpu.memory_space<vmem>>, vector<8x128xf32>
    %c0_2 = arith.constant 0 : index
    %c0_3 = arith.constant 0 : index
    %4 = vector.load %arg3[%c0_2, %c0_3] : memref<8x128xbf16, #tpu.memory_space<vmem>>, vector<8x128xbf16>
    %c0_4 = arith.constant 0 : index
    %c0_5 = arith.constant 0 : index
    %5 = vector.load %arg4[%c0_4, %c0_5] : memref<128x128xbf16, #tpu.memory_space<vmem>>, vector<128x128xbf16>
    %cst = arith.constant dense<0.000000e+00> : vector<8x128xf32>
    %6 = tpu.matmul %4, %5, %cst {dimension_numbers = #tpu.dot_dimension_numbers<[1], [0], [0], [1], [0, 0, 1, 1], [], []>} : vector<8x128xbf16>, vector<128x128xbf16>, vector<8x128xf32> -> vector<8x128xf32>
    %7 = arith.addf %3, %6 : vector<8x128xf32>
    %c0_6 = arith.constant 0 : index
    %c0_7 = arith.constant 0 : index
    %8 = vector.load %arg7[%c0_6, %c0_7] : memref<8x128xf32, #tpu.memory_space<vmem>>, vector<8x128xf32>
    tpu.vector_store %arg7[%c0_6, %c0_7], %7 {strides = array<i32>} : memref<8x128xf32, #tpu.memory_space<vmem>>, vector<8x128xf32>,
    %c0_i32_8 = arith.constant 0 : i32
    %9 = arith.cmpi eq, %arg2, %c0_i32_8 : i32
    %10 = arith.extui %9 : i1 to i32
    %c0_i32_9 = arith.constant 0 : i32
    %11 = arith.cmpi ne, %10, %c0_i32_9 : i32
    scf.if %11 {
      %c0_10 = arith.constant 0 : index
      %c0_11 = arith.constant 0 : index
      %12 = vector.load %arg7[%c0_10, %c0_11] : memref<8x128xf32, #tpu.memory_space<vmem>>, vector<8x128xf32>
      %c0_12 = arith.constant 0 : index
      %c0_13 = arith.constant 0 : index
      %13 = vector.load %arg5[%c0_12, %c0_13] : memref<1x128xf32, #tpu.memory_space<vmem>>, vector<1x128xf32>
      %14 = vector.broadcast %13 : vector<1x128xf32> to vector<8x128xf32>
      %15 = arith.addf %12, %14 : vector<8x128xf32>
      %cst_14 = arith.constant 0.000000e+00 : f32
      %16 = vector.broadcast %cst_14 : f32 to vector<8x128xf32>
      %17 = arith.maximumf %15, %16 : vector<8x128xf32>
      %18 = arith.truncf %17 : vector<8x128xf32> to vector<8x128xbf16>
      %c0_15 = arith.constant 0 : index
      %c0_16 = arith.constant 0 : index
      %19 = vector.load %arg6[%c0_15, %c0_16] : memref<8x128xbf16, #tpu.memory_space<vmem>>, vector<8x128xbf16>
      tpu.vector_store %arg6[%c0_15, %c0_16], %18 {strides = array<i32>} : memref<8x128xbf16, #tpu.memory_space<vmem>>, vector<8x128xbf16>,
    } else {
    }
    return
  }
  func.func @transform_0(%arg0: i32, %arg1: i32, %arg2: i32) -> (i32, i32) {
    %c0_i32 = arith.constant 0 : i32
    return %arg0, %arg2 : i32, i32
  }
  func.func @transform_1(%arg0: i32, %arg1: i32, %arg2: i32) -> (i32, i32) {
    %c0_i32 = arith.constant 0 : i32
    return %arg2, %arg1 : i32, i32
  }
  func.func @transform_2(%arg0: i32, %arg1: i32, %arg2: i32) -> (i32, i32) {
    %c0_i32 = arith.constant 0 : i32
    %c0_i32_0 = arith.constant 0 : i32
    return %c0_i32, %arg1 : i32, i32
  }
  func.func @transform_3(%arg0: i32, %arg1: i32, %arg2: i32) -> (i32, i32) {
    %c0_i32 = arith.constant 0 : i32
    return %arg0, %arg1 : i32, i32
  }
}

</mosaic_0001>

<llo_original>
// kernel: tpu_custom_call.1
$region0: #{tpu_custom_call.1}
  #allocation0 [shape = 'u32[]', space=smem, size = 0x4, offset = 0x4, fixed_abs, tag = 'smem constant byte address 0x4 - core index']
  #allocation1 [shape = 'u32[144,128]{1,0:T(1,128)}', space=vmem, size = 0x12000, scoped, tag = 'internal scratch']
  %s0 = inlined_call_operand.hbm [shape: bf16[8,128], index: 0, kind: input, shape index: {}]
  %s1 = inlined_call_operand.hbm [shape: bf16[128,128], index: 1, kind: input, shape index: {}]
  %s2 = inlined_call_operand.vmem [shape: f32[1,128], index: 2, kind: input, shape index: {}]
  %s3 = inlined_call_operand.hbm [shape: bf16[128,128], index: 3, kind: input, shape index: {}]
  %s4 = inlined_call_operand.vmem [shape: f32[1,128], index: 4, kind: input, shape index: {}]
  %s5 = inlined_call_operand.hbm [shape: bf16[128,128], index: 5, kind: input, shape index: {}]
  %s6 = inlined_call_operand.vmem [shape: f32[1,128], index: 6, kind: input, shape index: {}]
  %s7 = inlined_call_operand.hbm [shape: bf16[8,128], index: 7, kind: output, shape index: {}]
  %s8 = sld [smem:[#allocation0]]
  $region54: #{tpu_custom_call.1} parent=0
    _
  %s10 = ssub.s32 1, %s8
  %s11 = scalar_select 0, %s10, %s8
  $region1: #{tpu_custom_call.1} parent=0
    #allocation2 [shape = 'u8[2048]{0}', space=vmem, size = 0x800, scoped, tag = 'input window, operand 0, single buffered']
    #allocation3 [shape = 's32[1]{0}', space=sflag, size = 0x4, scoped, tag = 'scoped memory for tpu_custom_call.1']
    #allocation4 [shape = 's32[1]{0}', space=sflag, size = 0x4, scoped, tag = 'scoped memory for tpu_custom_call.1']
    #allocation5 [shape = 'u8[32768]{0}', space=vmem, size = 0x8000, scoped, tag = 'input window, operand 1, single buffered']
    #allocation6 [shape = 's32[1]{0}', space=sflag, size = 0x4, scoped, tag = 'scoped memory for tpu_custom_call.1']
    #allocation7 [shape = 'u8[32768]{0}', space=vmem, size = 0x8000, scoped, tag = 'input window, operand 3, single buffered']
    #allocation8 [shape = 'u8[32768]{0}', space=vmem, size = 0x8000, scoped, tag = 'input window, operand 5, single buffered']
    #allocation9 [shape = 's32[1]{0}', space=sflag, size = 0x4, scoped, tag = 'scoped memory for tpu_custom_call.1']
    #allocation10 [shape = 'u8[2048]{0}', space=vmem, size = 0x800, scoped, tag = 'output window, operand 0, single buffered']
    %12 = vsyncpa [#allocation3], 0
    %13 = vsyncpa [#allocation6], 0
    %14 = vsyncpa [#allocation9], 0
    %15 = vsyncpa [#allocation4], 0
    // Predicated region
    $region2: #{tpu_custom_call.1} parent=1 // pred_check
      _
    $region3: #{tpu_custom_call.1} parent=1 // pred_check_branch
      %17 = sbr.rel (0) target = $region5
    $region4: #{tpu_custom_call.1} parent=1 // pred_region
      %s19 = ssub.s32 64, 64
      %20 = vsyncadd [#allocation3], %s19
      %s22 = sshll.u32 [#allocation2], 4
      %s23 = int_to_ptr.vmem [resolvable:$true] %s22
      %25 = dma.hbm_to_vmem [thread:$0]  %s0, 64, %s23, [#allocation3]
    $region5: #{tpu_custom_call.1} parent=1 // pred_fallthru
      _
    // Predicated region
    $region6: #{tpu_custom_call.1} parent=1 // pred_check
      _
    $region7: #{tpu_custom_call.1} parent=1 // pred_check_branch
      %27 = sbr.rel (0) target = $region9
    $region8: #{tpu_custom_call.1} parent=1 // pred_region
      %s29 = ssub.s32 1024, 1024
      %30 = vsyncadd [#allocation6], %s29
      %s31 = sshll.u32 [#allocation5], 4
      %s32 = int_to_ptr.vmem [resolvable:$true] %s31
      %37 = dma.hbm_to_vmem [thread:$0]  %s1, 1024, %s32, [#allocation6], 64, 64, 4
    $region9: #{tpu_custom_call.1} parent=1 // pred_fallthru
      _
    // Predicated region
    $region10: #{tpu_custom_call.1} parent=1 // pred_check
      _
    $region11: #{tpu_custom_call.1} parent=1 // pred_check_branch
      %39 = sbr.rel (0) target = $region13
    $region12: #{tpu_custom_call.1} parent=1 // pred_region
      _
    $region13: #{tpu_custom_call.1} parent=1 // pred_fallthru
      _
    // Predicated region
    $region14: #{tpu_custom_call.1} parent=1 // pred_check
      _
    $region15: #{tpu_custom_call.1} parent=1 // pred_check_branch
      %41 = sbr.rel (0) target = $region17
    $region16: #{tpu_custom_call.1} parent=1 // pred_region
      %s43 = ssub.s32 1024, 1024
      %44 = vsyncadd [#allocation6], %s43
      %s45 = sshll.u32 [#allocation7], 4
      %s46 = int_to_ptr.vmem [resolvable:$true] %s45
      %51 = dma.hbm_to_vmem [thread:$0]  %s3, 1024, %s46, [#allocation6], 64, 64, 4
    $region17: #{tpu_custom_call.1} parent=1 // pred_fallthru
      _
    // Predicated region
    $region18: #{tpu_custom_call.1} parent=1 // pred_check
      _
    $region19: #{tpu_custom_call.1} parent=1 // pred_check_branch
      %53 = sbr.rel (0) target = $region21
    $region20: #{tpu_custom_call.1} parent=1 // pred_region
      _
    $region21: #{tpu_custom_call.1} parent=1 // pred_fallthru
      _
    // Predicated region
    $region22: #{tpu_custom_call.1} parent=1 // pred_check
      _
    $region23: #{tpu_custom_call.1} parent=1 // pred_check_branch
      %55 = sbr.rel (0) target = $region25
    $region24: #{tpu_custom_call.1} parent=1 // pred_region
      %s57 = ssub.s32 1024, 1024
      %58 = vsyncadd [#allocation9], %s57
      %s59 = sshll.u32 [#allocation8], 4
      %s60 = int_to_ptr.vmem [resolvable:$true] %s59
      %65 = dma.hbm_to_vmem [thread:$0]  %s5, 1024, %s60, [#allocation9], 64, 64, 4
    $region25: #{tpu_custom_call.1} parent=1 // pred_fallthru
      _
    // Predicated region
    $region26: #{tpu_custom_call.1} parent=1 // pred_check
      _
    $region27: #{tpu_custom_call.1} parent=1 // pred_check_branch
      %67 = sbr.rel (0) target = $region29
    $region28: #{tpu_custom_call.1} parent=1 // pred_region
      _
    $region29: #{tpu_custom_call.1} parent=1 // pred_fallthru
      _
    // Predicated region
    $region30: #{tpu_custom_call.1} parent=1 // pred_check
      _
    $region31: #{tpu_custom_call.1} parent=1 // pred_check_branch
      %69 = sbr.rel (0) target = $region33
    $region32: #{tpu_custom_call.1} parent=1 // pred_region
      %70 = dma.done [#allocation3], 64
    $region33: #{tpu_custom_call.1} parent=1 // pred_fallthru
      _
    // Predicated region
    $region34: #{tpu_custom_call.1} parent=1 // pred_check
      _
    $region35: #{tpu_custom_call.1} parent=1 // pred_check_branch
      %72 = sbr.rel (0) target = $region37
    $region36: #{tpu_custom_call.1} parent=1 // pred_region
      %73 = dma.done [#allocation6], 1024
    $region37: #{tpu_custom_call.1} parent=1 // pred_fallthru
      _
    // Predicated region
    $region38: #{tpu_custom_call.1} parent=1 // pred_check
      _
    $region39: #{tpu_custom_call.1} parent=1 // pred_check_branch
      %75 = sbr.rel (0) target = $region41
    $region40: #{tpu_custom_call.1} parent=1 // pred_region
      %76 = dma.done [#allocation6], 1024
    $region41: #{tpu_custom_call.1} parent=1 // pred_fallthru
      _
    // Predicated region
    $region42: #{tpu_custom_call.1} parent=1 // pred_check
      _
    $region43: #{tpu_custom_call.1} parent=1 // pred_check_branch
      %78 = sbr.rel (0) target = $region45
    $region44: #{tpu_custom_call.1} parent=1 // pred_region
      %79 = dma.done [#allocation9], 1024
    $region45: #{tpu_custom_call.1} parent=1 // pred_fallthru
      _
    %v81 = vld [vmem:[#allocation2] sm:$0xf]
    %v82 = vld [vmem:[#allocation5] sm:$0xf]
    %v83 = vld [vmem:[#allocation5 + $0x4] sm:$0xf]
    %v84 = vld [vmem:[#allocation5 + $0x8] sm:$0xf]
    %v85 = vld [vmem:[#allocation5 + $0xc] sm:$0xf]
    %v86 = vld [vmem:[#allocation5 + $0x10] sm:$0xf]
    %v87 = vld [vmem:[#allocation5 + $0x14] sm:$0xf]
    %v88 = vld [vmem:[#allocation5 + $0x18] sm:$0xf]
    %v89 = vld [vmem:[#allocation5 + $0x1c] sm:$0xf]
    %v90 = vld [vmem:[#allocation5 + $0x20] sm:$0xf]
    %v91 = vld [vmem:[#allocation5 + $0x24] sm:$0xf]
    %v92 = vld [vmem:[#allocation5 + $0x28] sm:$0xf]
    %v93 = vld [vmem:[#allocation5 + $0x2c] sm:$0xf]
    %v94 = vld [vmem:[#allocation5 + $0x30] sm:$0xf]
    %v95 = vld [vmem:[#allocation5 + $0x34] sm:$0xf]
    %v96 = vld [vmem:[#allocation5 + $0x38] sm:$0xf]
    %v97 = vld [vmem:[#allocation5 + $0x3c] sm:$0xf]
    %v98 = vld [vmem:[%s2] sm:$0x1]
    %v100 = vlaneseq
    %v101 = vshrl.u32 %v100, 7
    %v102 = vsub.s32 0, %v101
    %v103 = vrot.slane %v98, %v102
    %v121 = vunpack.c.l.b16 %v82
    %v122 = vunpack.c.l.b16 %v83
    %v123 = vunpack.c.l.b16 %v84
    %v124 = vunpack.c.l.b16 %v85
    %v125 = vunpack.c.l.b16 %v86
    %v126 = vunpack.c.l.b16 %v87
    %v127 = vunpack.c.l.b16 %v88
    %v128 = vunpack.c.l.b16 %v89
    %v129 = vunpack.c.l.b16 %v90
    %v130 = vunpack.c.l.b16 %v91
    %v131 = vunpack.c.l.b16 %v92
    %v132 = vunpack.c.l.b16 %v93
    %v133 = vunpack.c.l.b16 %v94
    %v134 = vunpack.c.l.b16 %v95
    %v135 = vunpack.c.l.b16 %v96
    %v136 = vunpack.c.l.b16 %v97
    %v137 = vpack.c.b16 %v122, %v121
    %v138 = vpack.c.b16 %v124, %v123
    %v139 = vpack.c.b16 %v126, %v125
    %v140 = vpack.c.b16 %v128, %v127
    %v141 = vpack.c.b16 %v130, %v129
    %v142 = vpack.c.b16 %v132, %v131
    %v143 = vpack.c.b16 %v134, %v133
    %v144 = vpack.c.b16 %v136, %v135
    %153 = vmatprep.subr.bf16.mxu0 0
    %154 = vmatpush1.bf16.msra.mxu0 %v137
    %155 = vmatprep.subr.bf16.mxu0 0
    %156 = vmatpush1.bf16.msra.mxu0 %v138
    %157 = vmatprep.subr.bf16.mxu0 0
    %158 = vmatpush1.bf16.msra.mxu0 %v139
    %159 = vmatprep.subr.bf16.mxu0 0
    %160 = vmatpush1.bf16.msra.mxu0 %v140
    %161 = vmatprep.subr.bf16.mxu0 0
    %162 = vmatpush1.bf16.msra.mxu0 %v141
    %163 = vmatprep.subr.bf16.mxu0 0
    %164 = vmatpush1.bf16.msra.mxu0 %v142
    %165 = vmatprep.subr.bf16.mxu0 0
    %166 = vmatpush1.bf16.msra.mxu0 %v143
    %167 = vmatprep.subr.bf16.mxu0 0
    %168 = vmatpush1.bf16.msra.mxu0 %v144
    %169 = vmatprep.subr.bf16.mxu0 0
    %170 = vmatpush1.bf16.msra.mxu0 0
    %171 = vmatprep.subr.bf16.mxu0 0
    %172 = vmatpush1.bf16.msra.mxu0 0
    %173 = vmatprep.subr.bf16.mxu0 0
    %174 = vmatpush1.bf16.msra.mxu0 0
    %175 = vmatprep.subr.bf16.mxu0 0
    %176 = vmatpush1.bf16.msra.mxu0 0
    %177 = vmatprep.subr.bf16.mxu0 0
    %178 = vmatpush1.bf16.msra.mxu0 0
    %179 = vmatprep.subr.bf16.mxu0 0
    %180 = vmatpush1.bf16.msra.mxu0 0
    %181 = vmatprep.subr.bf16.mxu0 0
    %182 = vmatpush1.bf16.msra.mxu0 0
    %183 = vmatprep.subr.bf16.mxu0 0
    %184 = vmatpush1.bf16.msra.mxu0 0
    %185 = vmatprep.mubr.bf16.mxu0 0
    %186 = vmatmul.mubr.bf16.gmra.mrb[0].mxu0 %v81
    %v187 = vpop.f32.mrb[0].mxu0
    %v188 = vadd.f32 %v103, %v187
    %v189 = vpop.f32.mrb[0].mxu0
    %v190 = vpop.f32.mrb[0].mxu0
    %v191 = vpop.f32.mrb[0].mxu0
    %192 = vdwg.mxu0
    %v193 = vmax.f32 %v188, 0.0
    %v194 = vpack.c.bf16 %v193, %v193
    %v195 = vld [vmem:[#allocation7] sm:$0xf]
    %v196 = vld [vmem:[#allocation7 + $0x4] sm:$0xf]
    %v197 = vld [vmem:[#allocation7 + $0x8] sm:$0xf]
    %v198 = vld [vmem:[#allocation7 + $0xc] sm:$0xf]
    %v199 = vld [vmem:[#allocation7 + $0x10] sm:$0xf]
    %v200 = vld [vmem:[#allocation7 + $0x14] sm:$0xf]
    %v201 = vld [vmem:[#allocation7 + $0x18] sm:$0xf]
    %v202 = vld [vmem:[#allocation7 + $0x1c] sm:$0xf]
    %v203 = vld [vmem:[#allocation7 + $0x20] sm:$0xf]
    %v204 = vld [vmem:[#allocation7 + $0x24] sm:$0xf]
    %v205 = vld [vmem:[#allocation7 + $0x28] sm:$0xf]
    %v206 = vld [vmem:[#allocation7 + $0x2c] sm:$0xf]
    %v207 = vld [vmem:[#allocation7 + $0x30] sm:$0xf]
    %v208 = vld [vmem:[#allocation7 + $0x34] sm:$0xf]
    %v209 = vld [vmem:[#allocation7 + $0x38] sm:$0xf]
    %v210 = vld [vmem:[#allocation7 + $0x3c] sm:$0xf]
    %v211 = vld [vmem:[%s4] sm:$0x1]
    %v213 = vlaneseq
    %v214 = vshrl.u32 %v213, 7
    %v215 = vsub.s32 0, %v214
    %v216 = vrot.slane %v211, %v215
    %v234 = vunpack.c.l.b16 %v195
    %v235 = vunpack.c.l.b16 %v196
    %v236 = vunpack.c.l.b16 %v197
    %v237 = vunpack.c.l.b16 %v198
    %v238 = vunpack.c.l.b16 %v199
    %v239 = vunpack.c.l.b16 %v200
    %v240 = vunpack.c.l.b16 %v201
    %v241 = vunpack.c.l.b16 %v202
    %v242 = vunpack.c.l.b16 %v203
    %v243 = vunpack.c.l.b16 %v204
    %v244 = vunpack.c.l.b16 %v205
    %v245 = vunpack.c.l.b16 %v206
    %v246 = vunpack.c.l.b16 %v207
    %v247 = vunpack.c.l.b16 %v208
    %v248 = vunpack.c.l.b16 %v209
    %v249 = vunpack.c.l.b16 %v210
    %v250 = vpack.c.b16 %v235, %v234
    %v251 = vpack.c.b16 %v237, %v236
    %v252 = vpack.c.b16 %v239, %v238
    %v253 = vpack.c.b16 %v241, %v240
    %v254 = vpack.c.b16 %v243, %v242
    %v255 = vpack.c.b16 %v245, %v244
    %v256 = vpack.c.b16 %v247, %v246
    %v257 = vpack.c.b16 %v249, %v248
    %266 = vmatprep.subr.bf16.mxu0 0
    %267 = vmatpush1.bf16.msra.mxu0 %v250
    %268 = vmatprep.subr.bf16.mxu0 0
    %269 = vmatpush1.bf16.msra.mxu0 %v251
    %270 = vmatprep.subr.bf16.mxu0 0
    %271 = vmatpush1.bf16.msra.mxu0 %v252
    %272 = vmatprep.subr.bf16.mxu0 0
    %273 = vmatpush1.bf16.msra.mxu0 %v253
    %274 = vmatprep.subr.bf16.mxu0 0
    %275 = vmatpush1.bf16.msra.mxu0 %v254
    %276 = vmatprep.subr.bf16.mxu0 0
    %277 = vmatpush1.bf16.msra.mxu0 %v255
    %278 = vmatprep.subr.bf16.mxu0 0
    %279 = vmatpush1.bf16.msra.mxu0 %v256
    %280 = vmatprep.subr.bf16.mxu0 0
    %281 = vmatpush1.bf16.msra.mxu0 %v257
    %282 = vmatprep.subr.bf16.mxu0 0
    %283 = vmatpush1.bf16.msra.mxu0 0
    %284 = vmatprep.subr.bf16.mxu0 0
    %285 = vmatpush1.bf16.msra.mxu0 0
    %286 = vmatprep.subr.bf16.mxu0 0
    %287 = vmatpush1.bf16.msra.mxu0 0
    %288 = vmatprep.subr.bf16.mxu0 0
    %289 = vmatpush1.bf16.msra.mxu0 0
    %290 = vmatprep.subr.bf16.mxu0 0
    %291 = vmatpush1.bf16.msra.mxu0 0
    %292 = vmatprep.subr.bf16.mxu0 0
    %293 = vmatpush1.bf16.msra.mxu0 0
    %294 = vmatprep.subr.bf16.mxu0 0
    %295 = vmatpush1.bf16.msra.mxu0 0
    %296 = vmatprep.subr.bf16.mxu0 0
    %297 = vmatpush1.bf16.msra.mxu0 0
    %298 = vmatprep.mubr.bf16.mxu0 0
    %299 = vmatmul.mubr.bf16.gmra.mrb[0].mxu0 %v194
    %v300 = vpop.f32.mrb[0].mxu0
    %v301 = vadd.f32 %v216, %v300
    %v302 = vpop.f32.mrb[0].mxu0
    %v303 = vpop.f32.mrb[0].mxu0
    %v304 = vpop.f32.mrb[0].mxu0
    %305 = vdwg.mxu0
    %v306 = vmax.f32 %v301, 0.0
    %v307 = vpack.c.bf16 %v306, %v306
    %v308 = vld [vmem:[#allocation8] sm:$0xf]
    %v309 = vld [vmem:[#allocation8 + $0x4] sm:$0xf]
    %v310 = vld [vmem:[#allocation8 + $0x8] sm:$0xf]
    %v311 = vld [vmem:[#allocation8 + $0xc] sm:$0xf]
    %v312 = vld [vmem:[#allocation8 + $0x10] sm:$0xf]
    %v313 = vld [vmem:[#allocation8 + $0x14] sm:$0xf]
    %v314 = vld [vmem:[#allocation8 + $0x18] sm:$0xf]
    %v315 = vld [vmem:[#allocation8 + $0x1c] sm:$0xf]
    %v316 = vld [vmem:[#allocation8 + $0x20] sm:$0xf]
    %v317 = vld [vmem:[#allocation8 + $0x24] sm:$0xf]
    %v318 = vld [vmem:[#allocation8 + $0x28] sm:$0xf]
    %v319 = vld [vmem:[#allocation8 + $0x2c] sm:$0xf]
    %v320 = vld [vmem:[#allocation8 + $0x30] sm:$0xf]
    %v321 = vld [vmem:[#allocation8 + $0x34] sm:$0xf]
    %v322 = vld [vmem:[#allocation8 + $0x38] sm:$0xf]
    %v323 = vld [vmem:[#allocation8 + $0x3c] sm:$0xf]
    %v324 = vld [vmem:[%s6] sm:$0x1]
    %v326 = vlaneseq
    %v327 = vshrl.u32 %v326, 7
    %v328 = vsub.s32 0, %v327
    %v329 = vrot.slane %v324, %v328
    %v347 = vunpack.c.l.b16 %v308
    %v348 = vunpack.c.l.b16 %v309
    %v349 = vunpack.c.l.b16 %v310
    %v350 = vunpack.c.l.b16 %v311
    %v351 = vunpack.c.l.b16 %v312
    %v352 = vunpack.c.l.b16 %v313
    %v353 = vunpack.c.l.b16 %v314
    %v354 = vunpack.c.l.b16 %v315
    %v355 = vunpack.c.l.b16 %v316
    %v356 = vunpack.c.l.b16 %v317
    %v357 = vunpack.c.l.b16 %v318
    %v358 = vunpack.c.l.b16 %v319
    %v359 = vunpack.c.l.b16 %v320
    %v360 = vunpack.c.l.b16 %v321
    %v361 = vunpack.c.l.b16 %v322
    %v362 = vunpack.c.l.b16 %v323
    %v363 = vpack.c.b16 %v348, %v347
    %v364 = vpack.c.b16 %v350, %v349
    %v365 = vpack.c.b16 %v352, %v351
    %v366 = vpack.c.b16 %v354, %v353
    %v367 = vpack.c.b16 %v356, %v355
    %v368 = vpack.c.b16 %v358, %v357
    %v369 = vpack.c.b16 %v360, %v359
    %v370 = vpack.c.b16 %v362, %v361
    %379 = vmatprep.subr.bf16.mxu0 0
    %380 = vmatpush1.bf16.msra.mxu0 %v363
    %381 = vmatprep.subr.bf16.mxu0 0
    %382 = vmatpush1.bf16.msra.mxu0 %v364
    %383 = vmatprep.subr.bf16.mxu0 0
    %384 = vmatpush1.bf16.msra.mxu0 %v365
    %385 = vmatprep.subr.bf16.mxu0 0
    %386 = vmatpush1.bf16.msra.mxu0 %v366
    %387 = vmatprep.subr.bf16.mxu0 0
    %388 = vmatpush1.bf16.msra.mxu0 %v367
    %389 = vmatprep.subr.bf16.mxu0 0
    %390 = vmatpush1.bf16.msra.mxu0 %v368
    %391 = vmatprep.subr.bf16.mxu0 0
    %392 = vmatpush1.bf16.msra.mxu0 %v369
    %393 = vmatprep.subr.bf16.mxu0 0
    %394 = vmatpush1.bf16.msra.mxu0 %v370
    %395 = vmatprep.subr.bf16.mxu0 0
    %396 = vmatpush1.bf16.msra.mxu0 0
    %397 = vmatprep.subr.bf16.mxu0 0
    %398 = vmatpush1.bf16.msra.mxu0 0
    %399 = vmatprep.subr.bf16.mxu0 0
    %400 = vmatpush1.bf16.msra.mxu0 0
    %401 = vmatprep.subr.bf16.mxu0 0
    %402 = vmatpush1.bf16.msra.mxu0 0
    %403 = vmatprep.subr.bf16.mxu0 0
    %404 = vmatpush1.bf16.msra.mxu0 0
    %405 = vmatprep.subr.bf16.mxu0 0
    %406 = vmatpush1.bf16.msra.mxu0 0
    %407 = vmatprep.subr.bf16.mxu0 0
    %408 = vmatpush1.bf16.msra.mxu0 0
    %409 = vmatprep.subr.bf16.mxu0 0
    %410 = vmatpush1.bf16.msra.mxu0 0
    %411 = vmatprep.mubr.bf16.mxu0 0
    %412 = vmatmul.mubr.bf16.gmra.mrb[0].mxu0 %v307
    %v413 = vpop.f32.mrb[0].mxu0
    %v414 = vadd.f32 %v329, %v413
    %v415 = vpop.f32.mrb[0].mxu0
    %v416 = vpop.f32.mrb[0].mxu0
    %v417 = vpop.f32.mrb[0].mxu0
    %418 = vdwg.mxu0
    %v419 = vpack.c.bf16 %v414, %v414
    %420 = vst [vmem:[#allocation10] sm:$0xf] %v419
    // Predicated region
    $region46: #{tpu_custom_call.1} parent=1 // pred_check
      _
    $region47: #{tpu_custom_call.1} parent=1 // pred_check_branch
      %422 = sbr.rel (0) target = $region49
    $region48: #{tpu_custom_call.1} parent=1 // pred_region
      %s424 = ssub.s32 64, 64
      %425 = vsyncadd [#allocation4], %s424
      %s427 = sshll.u32 [#allocation10], 4
      %s428 = int_to_ptr.vmem [resolvable:$true] %s427
      %430 = dma.vmem_to_hbm [thread:$0]  %s428, 64, %s7, [#allocation4]
    $region49: #{tpu_custom_call.1} parent=1 // pred_fallthru
      _
    // Predicated region
    $region50: #{tpu_custom_call.1} parent=1 // pred_check
      _
    $region51: #{tpu_custom_call.1} parent=1 // pred_check_branch
      %432 = sbr.rel (0) target = $region53
    $region52: #{tpu_custom_call.1} parent=1 // pred_region
      %433 = dma.done [#allocation4], 64
    $region53: #{tpu_custom_call.1} parent=1 // pred_fallthru
      _
    %434 = vsyncpa [#allocation3], 1
    %435 = vsyncpa [#allocation6], 1
    %436 = vsyncpa [#allocation9], 1
    %437 = vsyncpa [#allocation4], 1

// kernel: tpu_custom_call.1
$region0: #{tpu_custom_call.1}
  #allocation0 [shape = 'u32[]', space=smem, size = 0x4, offset = 0x4, fixed_abs, tag = 'smem constant byte address 0x4 - core index']
  #allocation1 [shape = 'u32[144,128]{1,0:T(1,128)}', space=vmem, size = 0x12000, scoped, tag = 'internal scratch']
  %s0 = inlined_call_operand.hbm [shape: bf16[8,128], index: 0, kind: input, shape index: {}]
  %s1 = inlined_call_operand.hbm [shape: bf16[128,128], index: 1, kind: input, shape index: {}]
  %s2 = inlined_call_operand.vmem [shape: f32[1,128], index: 2, kind: input, shape index: {}]
  %s3 = inlined_call_operand.hbm [shape: bf16[128,128], index: 3, kind: input, shape index: {}]
  %s4 = inlined_call_operand.vmem [shape: f32[1,128], index: 4, kind: input, shape index: {}]
  %s5 = inlined_call_operand.hbm [shape: bf16[128,128], index: 5, kind: input, shape index: {}]
  %s6 = inlined_call_operand.vmem [shape: f32[1,128], index: 6, kind: input, shape index: {}]
  %s7 = inlined_call_operand.hbm [shape: bf16[8,128], index: 7, kind: output, shape index: {}]
  %s8 = sld [smem:[#allocation0]]
  $region54: #{tpu_custom_call.1} parent=0
    _
  %s10 = ssub.s32 1, %s8
  %s11 = scalar_select 0, %s10, %s8
  $region1: #{tpu_custom_call.1} parent=0
    #allocation2 [shape = 'u8[2048]{0}', space=vmem, size = 0x800, scoped, tag = 'input window, operand 0, single buffered']
    #allocation3 [shape = 's32[1]{0}', space=sflag, size = 0x4, scoped, tag = 'scoped memory for tpu_custom_call.1']
    #allocation4 [shape = 's32[1]{0}', space=sflag, size = 0x4, scoped, tag = 'scoped memory for tpu_custom_call.1']
    #allocation5 [shape = 'u8[32768]{0}', space=vmem, size = 0x8000, scoped, tag = 'input window, operand 1, single buffered']
    #allocation6 [shape = 's32[1]{0}', space=sflag, size = 0x4, scoped, tag = 'scoped memory for tpu_custom_call.1']
    #allocation7 [shape = 'u8[32768]{0}', space=vmem, size = 0x8000, scoped, tag = 'input window, operand 3, single buffered']
    #allocation8 [shape = 'u8[32768]{0}', space=vmem, size = 0x8000, scoped, tag = 'input window, operand 5, single buffered']
    #allocation9 [shape = 's32[1]{0}', space=sflag, size = 0x4, scoped, tag = 'scoped memory for tpu_custom_call.1']
    #allocation10 [shape = 'u8[2048]{0}', space=vmem, size = 0x800, scoped, tag = 'output window, operand 0, single buffered']
    %12 = vsyncpa [#allocation3], 0
    %13 = vsyncpa [#allocation6], 0
    %14 = vsyncpa [#allocation9], 0
    %15 = vsyncpa [#allocation4], 0
    // Predicated region
    $region2: #{tpu_custom_call.1} parent=1 // pred_check
      _
    $region3: #{tpu_custom_call.1} parent=1 // pred_check_branch
      %17 = sbr.rel (0) target = $region5
    $region4: #{tpu_custom_call.1} parent=1 // pred_region
      %s19 = ssub.s32 64, 64
      %20 = vsyncadd [#allocation3], %s19
      %s22 = sshll.u32 [#allocation2], 4
      %s23 = int_to_ptr.vmem [resolvable:$true] %s22
      %25 = dma.hbm_to_vmem [thread:$0]  %s0, 64, %s23, [#allocation3]
    $region5: #{tpu_custom_call.1} parent=1 // pred_fallthru
      _
    // Predicated region
    $region6: #{tpu_custom_call.1} parent=1 // pred_check
      _
    $region7: #{tpu_custom_call.1} parent=1 // pred_check_branch
      %27 = sbr.rel (0) target = $region9
    $region8: #{tpu_custom_call.1} parent=1 // pred_region
      %s29 = ssub.s32 1024, 1024
      %30 = vsyncadd [#allocation6], %s29
      %s31 = sshll.u32 [#allocation5], 4
      %s32 = int_to_ptr.vmem [resolvable:$true] %s31
      %37 = dma.hbm_to_vmem [thread:$0]  %s1, 1024, %s32, [#allocation6], 64, 64, 4
    $region9: #{tpu_custom_call.1} parent=1 // pred_fallthru
      _
    // Predicated region
    $region10: #{tpu_custom_call.1} parent=1 // pred_check
      _
    $region11: #{tpu_custom_call.1} parent=1 // pred_check_branch
      %39 = sbr.rel (0) target = $region13
    $region12: #{tpu_custom_call.1} parent=1 // pred_region
      _
    $region13: #{tpu_custom_call.1} parent=1 // pred_fallthru
      _
    // Predicated region
    $region14: #{tpu_custom_call.1} parent=1 // pred_check
      _
    $region15: #{tpu_custom_call.1} parent=1 // pred_check_branch
      %41 = sbr.rel (0) target = $region17
    $region16: #{tpu_custom_call.1} parent=1 // pred_region
      %s43 = ssub.s32 1024, 1024
      %44 = vsyncadd [#allocation6], %s43
      %s45 = sshll.u32 [#allocation7], 4
      %s46 = int_to_ptr.vmem [resolvable:$true] %s45
      %51 = dma.hbm_to_vmem [thread:$0]  %s3, 1024, %s46, [#allocation6], 64, 64, 4
    $region17: #{tpu_custom_call.1} parent=1 // pred_fallthru
      _
    // Predicated region
    $region18: #{tpu_custom_call.1} parent=1 // pred_check
      _
    $region19: #{tpu_custom_call.1} parent=1 // pred_check_branch
      %53 = sbr.rel (0) target = $region21
    $region20: #{tpu_custom_call.1} parent=1 // pred_region
      _
    $region21: #{tpu_custom_call.1} parent=1 // pred_fallthru
      _
    // Predicated region
    $region22: #{tpu_custom_call.1} parent=1 // pred_check
      _
    $region23: #{tpu_custom_call.1} parent=1 // pred_check_branch
      %55 = sbr.rel (0) target = $region25
    $region24: #{tpu_custom_call.1} parent=1 // pred_region
      %s57 = ssub.s32 1024, 1024
      %58 = vsyncadd [#allocation9], %s57
      %s59 = sshll.u32 [#allocation8], 4
      %s60 = int_to_ptr.vmem [resolvable:$true] %s59
      %65 = dma.hbm_to_vmem [thread:$0]  %s5, 1024, %s60, [#allocation9], 64, 64, 4
    $region25: #{tpu_custom_call.1} parent=1 // pred_fallthru
      _
    // Predicated region
    $region26: #{tpu_custom_call.1} parent=1 // pred_check
      _
    $region27: #{tpu_custom_call.1} parent=1 // pred_check_branch
      %67 = sbr.rel (0) target = $region29
    $region28: #{tpu_custom_call.1} parent=1 // pred_region
      _
    $region29: #{tpu_custom_call.1} parent=1 // pred_fallthru
      _
    // Predicated region
    $region30: #{tpu_custom_call.1} parent=1 // pred_check
      _
    $region31: #{tpu_custom_call.1} parent=1 // pred_check_branch
      %69 = sbr.rel (0) target = $region33
    $region32: #{tpu_custom_call.1} parent=1 // pred_region
      %70 = dma.done [#allocation3], 64
    $region33: #{tpu_custom_call.1} parent=1 // pred_fallthru
      _
    // Predicated region
    $region34: #{tpu_custom_call.1} parent=1 // pred_check
      _
    $region35: #{tpu_custom_call.1} parent=1 // pred_check_branch
      %72 = sbr.rel (0) target = $region37
    $region36: #{tpu_custom_call.1} parent=1 // pred_region
      %73 = dma.done [#allocation6], 1024
    $region37: #{tpu_custom_call.1} parent=1 // pred_fallthru
      _
    // Predicated region
    $region38: #{tpu_custom_call.1} parent=1 // pred_check
      _
    $region39: #{tpu_custom_call.1} parent=1 // pred_check_branch
      %75 = sbr.rel (0) target = $region41
    $region40: #{tpu_custom_call.1} parent=1 // pred_region
      %76 = dma.done [#allocation6], 1024
    $region41: #{tpu_custom_call.1} parent=1 // pred_fallthru
      _
    // Predicated region
    $region42: #{tpu_custom_call.1} parent=1 // pred_check
      _
    $region43: #{tpu_custom_call.1} parent=1 // pred_check_branch
      %78 = sbr.rel (0) target = $region45
    $region44: #{tpu_custom_call.1} parent=1 // pred_region
      %79 = dma.done [#allocation9], 1024
    $region45: #{tpu_custom_call.1} parent=1 // pred_fallthru
      _
    %v81 = vld [vmem:[#allocation2] sm:$0xf]
    %v82 = vld [vmem:[#allocation5] sm:$0xf]
    %v83 = vld [vmem:[#allocation5 + $0x4] sm:$0xf]
    %v84 = vld [vmem:[#allocation5 + $0x8] sm:$0xf]
    %v85 = vld [vmem:[#allocation5 + $0xc] sm:$0xf]
    %v86 = vld [vmem:[#allocation5 + $0x10] sm:$0xf]
    %v87 = vld [vmem:[#allocation5 + $0x14] sm:$0xf]
    %v88 = vld [vmem:[#allocation5 + $0x18] sm:$0xf]
    %v89 = vld [vmem:[#allocation5 + $0x1c] sm:$0xf]
    %v90 = vld [vmem:[#allocation5 + $0x20] sm:$0xf]
    %v91 = vld [vmem:[#allocation5 + $0x24] sm:$0xf]
    %v92 = vld [vmem:[#allocation5 + $0x28] sm:$0xf]
    %v93 = vld [vmem:[#allocation5 + $0x2c] sm:$0xf]
    %v94 = vld [vmem:[#allocation5 + $0x30] sm:$0xf]
    %v95 = vld [vmem:[#allocation5 + $0x34] sm:$0xf]
    %v96 = vld [vmem:[#allocation5 + $0x38] sm:$0xf]
    %v97 = vld [vmem:[#allocation5 + $0x3c] sm:$0xf]
    %v98 = vld [vmem:[%s2] sm:$0x1]
    %v100 = vlaneseq
    %v101 = vshrl.u32 %v100, 7
    %v102 = vsub.s32 0, %v101
    %v103 = vrot.slane %v98, %v102
    %v121 = vunpack.c.l.b16 %v82
    %v122 = vunpack.c.l.b16 %v83
    %v123 = vunpack.c.l.b16 %v84
    %v124 = vunpack.c.l.b16 %v85
    %v125 = vunpack.c.l.b16 %v86
    %v126 = vunpack.c.l.b16 %v87
    %v127 = vunpack.c.l.b16 %v88
    %v128 = vunpack.c.l.b16 %v89
    %v129 = vunpack.c.l.b16 %v90
    %v130 = vunpack.c.l.b16 %v91
    %v131 = vunpack.c.l.b16 %v92
    %v132 = vunpack.c.l.b16 %v93
    %v133 = vunpack.c.l.b16 %v94
    %v134 = vunpack.c.l.b16 %v95
    %v135 = vunpack.c.l.b16 %v96
    %v136 = vunpack.c.l.b16 %v97
    %v137 = vpack.c.b16 %v122, %v121
    %v138 = vpack.c.b16 %v124, %v123
    %v139 = vpack.c.b16 %v126, %v125
    %v140 = vpack.c.b16 %v128, %v127
    %v141 = vpack.c.b16 %v130, %v129
    %v142 = vpack.c.b16 %v132, %v131
    %v143 = vpack.c.b16 %v134, %v133
    %v144 = vpack.c.b16 %v136, %v135
    %153 = vmatprep.subr.bf16.mxu0 0
    %154 = vmatpush1.bf16.msra.mxu0 %v137
    %155 = vmatprep.subr.bf16.mxu0 0
    %156 = vmatpush1.bf16.msra.mxu0 %v138
    %157 = vmatprep.subr.bf16.mxu0 0
    %158 = vmatpush1.bf16.msra.mxu0 %v139
    %159 = vmatprep.subr.bf16.mxu0 0
    %160 = vmatpush1.bf16.msra.mxu0 %v140
    %161 = vmatprep.subr.bf16.mxu0 0
    %162 = vmatpush1.bf16.msra.mxu0 %v141
    %163 = vmatprep.subr.bf16.mxu0 0
    %164 = vmatpush1.bf16.msra.mxu0 %v142
    %165 = vmatprep.subr.bf16.mxu0 0
    %166 = vmatpush1.bf16.msra.mxu0 %v143
    %167 = vmatprep.subr.bf16.mxu0 0
    %168 = vmatpush1.bf16.msra.mxu0 %v144
    %169 = vmatprep.subr.bf16.mxu0 0
    %170 = vmatpush1.bf16.msra.mxu0 0
    %171 = vmatprep.subr.bf16.mxu0 0
    %172 = vmatpush1.bf16.msra.mxu0 0
    %173 = vmatprep.subr.bf16.mxu0 0
    %174 = vmatpush1.bf16.msra.mxu0 0
    %175 = vmatprep.subr.bf16.mxu0 0
    %176 = vmatpush1.bf16.msra.mxu0 0
    %177 = vmatprep.subr.bf16.mxu0 0
    %178 = vmatpush1.bf16.msra.mxu0 0
    %179 = vmatprep.subr.bf16.mxu0 0
    %180 = vmatpush1.bf16.msra.mxu0 0
    %181 = vmatprep.subr.bf16.mxu0 0
    %182 = vmatpush1.bf16.msra.mxu0 0
    %183 = vmatprep.subr.bf16.mxu0 0
    %184 = vmatpush1.bf16.msra.mxu0 0
    %185 = vmatprep.mubr.bf16.mxu0 0
    %186 = vmatmul.mubr.bf16.gmra.mrb[0].mxu0 %v81
    %v187 = vpop.f32.mrb[0].mxu0
    %v188 = vadd.f32 %v103, %v187
    %v189 = vpop.f32.mrb[0].mxu0
    %v190 = vpop.f32.mrb[0].mxu0
    %v191 = vpop.f32.mrb[0].mxu0
    %192 = vdwg.mxu0
    %v193 = vmax.f32 %v188, 0.0
    %v194 = vpack.c.bf16 %v193, %v193
    %v195 = vld [vmem:[#allocation7] sm:$0xf]
    %v196 = vld [vmem:[#allocation7 + $0x4] sm:$0xf]
    %v197 = vld [vmem:[#allocation7 + $0x8] sm:$0xf]
    %v198 = vld [vmem:[#allocation7 + $0xc] sm:$0xf]
    %v199 = vld [vmem:[#allocation7 + $0x10] sm:$0xf]
    %v200 = vld [vmem:[#allocation7 + $0x14] sm:$0xf]
    %v201 = vld [vmem:[#allocation7 + $0x18] sm:$0xf]
    %v202 = vld [vmem:[#allocation7 + $0x1c] sm:$0xf]
    %v203 = vld [vmem:[#allocation7 + $0x20] sm:$0xf]
    %v204 = vld [vmem:[#allocation7 + $0x24] sm:$0xf]
    %v205 = vld [vmem:[#allocation7 + $0x28] sm:$0xf]
    %v206 = vld [vmem:[#allocation7 + $0x2c] sm:$0xf]
    %v207 = vld [vmem:[#allocation7 + $0x30] sm:$0xf]
    %v208 = vld [vmem:[#allocation7 + $0x34] sm:$0xf]
    %v209 = vld [vmem:[#allocation7 + $0x38] sm:$0xf]
    %v210 = vld [vmem:[#allocation7 + $0x3c] sm:$0xf]
    %v211 = vld [vmem:[%s4] sm:$0x1]
    %v213 = vlaneseq
    %v214 = vshrl.u32 %v213, 7
    %v215 = vsub.s32 0, %v214
    %v216 = vrot.slane %v211, %v215
    %v234 = vunpack.c.l.b16 %v195
    %v235 = vunpack.c.l.b16 %v196
    %v236 = vunpack.c.l.b16 %v197
    %v237 = vunpack.c.l.b16 %v198
    %v238 = vunpack.c.l.b16 %v199
    %v239 = vunpack.c.l.b16 %v200
    %v240 = vunpack.c.l.b16 %v201
    %v241 = vunpack.c.l.b16 %v202
    %v242 = vunpack.c.l.b16 %v203
    %v243 = vunpack.c.l.b16 %v204
    %v244 = vunpack.c.l.b16 %v205
    %v245 = vunpack.c.l.b16 %v206
    %v246 = vunpack.c.l.b16 %v207
    %v247 = vunpack.c.l.b16 %v208
    %v248 = vunpack.c.l.b16 %v209
    %v249 = vunpack.c.l.b16 %v210
    %v250 = vpack.c.b16 %v235, %v234
    %v251 = vpack.c.b16 %v237, %v236
    %v252 = vpack.c.b16 %v239, %v238
    %v253 = vpack.c.b16 %v241, %v240
    %v254 = vpack.c.b16 %v243, %v242
    %v255 = vpack.c.b16 %v245, %v244
    %v256 = vpack.c.b16 %v247, %v246
    %v257 = vpack.c.b16 %v249, %v248
    %266 = vmatprep.subr.bf16.mxu0 0
    %267 = vmatpush1.bf16.msra.mxu0 %v250
    %268 = vmatprep.subr.bf16.mxu0 0
    %269 = vmatpush1.bf16.msra.mxu0 %v251
    %270 = vmatprep.subr.bf16.mxu0 0
    %271 = vmatpush1.bf16.msra.mxu0 %v252
    %272 = vmatprep.subr.bf16.mxu0 0
    %273 = vmatpush1.bf16.msra.mxu0 %v253
    %274 = vmatprep.subr.bf16.mxu0 0
    %275 = vmatpush1.bf16.msra.mxu0 %v254
    %276 = vmatprep.subr.bf16.mxu0 0
    %277 = vmatpush1.bf16.msra.mxu0 %v255
    %278 = vmatprep.subr.bf16.mxu0 0
    %279 = vmatpush1.bf16.msra.mxu0 %v256
    %280 = vmatprep.subr.bf16.mxu0 0
    %281 = vmatpush1.bf16.msra.mxu0 %v257
    %282 = vmatprep.subr.bf16.mxu0 0
    %283 = vmatpush1.bf16.msra.mxu0 0
    %284 = vmatprep.subr.bf16.mxu0 0
    %285 = vmatpush1.bf16.msra.mxu0 0
    %286 = vmatprep.subr.bf16.mxu0 0
    %287 = vmatpush1.bf16.msra.mxu0 0
    %288 = vmatprep.subr.bf16.mxu0 0
    %289 = vmatpush1.bf16.msra.mxu0 0
    %290 = vmatprep.subr.bf16.mxu0 0
    %291 = vmatpush1.bf16.msra.mxu0 0
    %292 = vmatprep.subr.bf16.mxu0 0
    %293 = vmatpush1.bf16.msra.mxu0 0
    %294 = vmatprep.subr.bf16.mxu0 0
    %295 = vmatpush1.bf16.msra.mxu0 0
    %296 = vmatprep.subr.bf16.mxu0 0
    %297 = vmatpush1.bf16.msra.mxu0 0
    %298 = vmatprep.mubr.bf16.mxu0 0
    %299 = vmatmul.mubr.bf16.gmra.mrb[0].mxu0 %v194
    %v300 = vpop.f32.mrb[0].mxu0
    %v301 = vadd.f32 %v216, %v300
    %v302 = vpop.f32.mrb[0].mxu0
    %v303 = vpop.f32.mrb[0].mxu0
    %v304 = vpop.f32.mrb[0].mxu0
    %305 = vdwg.mxu0
    %v306 = vmax.f32 %v301, 0.0
    %v307 = vpack.c.bf16 %v306, %v306
    %v308 = vld [vmem:[#allocation8] sm:$0xf]
    %v309 = vld [vmem:[#allocation8 + $0x4] sm:$0xf]
    %v310 = vld [vmem:[#allocation8 + $0x8] sm:$0xf]
    %v311 = vld [vmem:[#allocation8 + $0xc] sm:$0xf]
    %v312 = vld [vmem:[#allocation8 + $0x10] sm:$0xf]
    %v313 = vld [vmem:[#allocation8 + $0x14] sm:$0xf]
    %v314 = vld [vmem:[#allocation8 + $0x18] sm:$0xf]
    %v315 = vld [vmem:[#allocation8 + $0x1c] sm:$0xf]
    %v316 = vld [vmem:[#allocation8 + $0x20] sm:$0xf]
    %v317 = vld [vmem:[#allocation8 + $0x24] sm:$0xf]
    %v318 = vld [vmem:[#allocation8 + $0x28] sm:$0xf]
    %v319 = vld [vmem:[#allocation8 + $0x2c] sm:$0xf]
    %v320 = vld [vmem:[#allocation8 + $0x30] sm:$0xf]
    %v321 = vld [vmem:[#allocation8 + $0x34] sm:$0xf]
    %v322 = vld [vmem:[#allocation8 + $0x38] sm:$0xf]
    %v323 = vld [vmem:[#allocation8 + $0x3c] sm:$0xf]
    %v324 = vld [vmem:[%s6] sm:$0x1]
    %v326 = vlaneseq
    %v327 = vshrl.u32 %v326, 7
    %v328 = vsub.s32 0, %v327
    %v329 = vrot.slane %v324, %v328
    %v347 = vunpack.c.l.b16 %v308
    %v348 = vunpack.c.l.b16 %v309
    %v349 = vunpack.c.l.b16 %v310
    %v350 = vunpack.c.l.b16 %v311
    %v351 = vunpack.c.l.b16 %v312
    %v352 = vunpack.c.l.b16 %v313
    %v353 = vunpack.c.l.b16 %v314
    %v354 = vunpack.c.l.b16 %v315
    %v355 = vunpack.c.l.b16 %v316
    %v356 = vunpack.c.l.b16 %v317
    %v357 = vunpack.c.l.b16 %v318
    %v358 = vunpack.c.l.b16 %v319
    %v359 = vunpack.c.l.b16 %v320
    %v360 = vunpack.c.l.b16 %v321
    %v361 = vunpack.c.l.b16 %v322
    %v362 = vunpack.c.l.b16 %v323
    %v363 = vpack.c.b16 %v348, %v347
    %v364 = vpack.c.b16 %v350, %v349
    %v365 = vpack.c.b16 %v352, %v351
    %v366 = vpack.c.b16 %v354, %v353
    %v367 = vpack.c.b16 %v356, %v355
    %v368 = vpack.c.b16 %v358, %v357
    %v369 = vpack.c.b16 %v360, %v359
    %v370 = vpack.c.b16 %v362, %v361
    %379 = vmatprep.subr.bf16.mxu0 0
    %380 = vmatpush1.bf16.msra.mxu0 %v363
    %381 = vmatprep.subr.bf16.mxu0 0
    %382 = vmatpush1.bf16.msra.mxu0 %v364
    %383 = vmatprep.subr.bf16.mxu0 0
    %384 = vmatpush1.bf16.msra.mxu0 %v365
    %385 = vmatprep.subr.bf16.mxu0 0
    %386 = vmatpush1.bf16.msra.mxu0 %v366
    %387 = vmatprep.subr.bf16.mxu0 0
    %388 = vmatpush1.bf16.msra.mxu0 %v367
    %389 = vmatprep.subr.bf16.mxu0 0
    %390 = vmatpush1.bf16.msra.mxu0 %v368
    %391 = vmatprep.subr.bf16.mxu0 0
    %392 = vmatpush1.bf16.msra.mxu0 %v369
    %393 = vmatprep.subr.bf16.mxu0 0
    %394 = vmatpush1.bf16.msra.mxu0 %v370
    %395 = vmatprep.subr.bf16.mxu0 0
    %396 = vmatpush1.bf16.msra.mxu0 0
    %397 = vmatprep.subr.bf16.mxu0 0
    %398 = vmatpush1.bf16.msra.mxu0 0
    %399 = vmatprep.subr.bf16.mxu0 0
    %400 = vmatpush1.bf16.msra.mxu0 0
    %401 = vmatprep.subr.bf16.mxu0 0
    %402 = vmatpush1.bf16.msra.mxu0 0
    %403 = vmatprep.subr.bf16.mxu0 0
    %404 = vmatpush1.bf16.msra.mxu0 0
    %405 = vmatprep.subr.bf16.mxu0 0
    %406 = vmatpush1.bf16.msra.mxu0 0
    %407 = vmatprep.subr.bf16.mxu0 0
    %408 = vmatpush1.bf16.msra.mxu0 0
    %409 = vmatprep.subr.bf16.mxu0 0
    %410 = vmatpush1.bf16.msra.mxu0 0
    %411 = vmatprep.mubr.bf16.mxu0 0
    %412 = vmatmul.mubr.bf16.gmra.mrb[0].mxu0 %v307
    %v413 = vpop.f32.mrb[0].mxu0
    %v414 = vadd.f32 %v329, %v413
    %v415 = vpop.f32.mrb[0].mxu0
    %v416 = vpop.f32.mrb[0].mxu0
    %v417 = vpop.f32.mrb[0].mxu0
    %418 = vdwg.mxu0
    %v419 = vpack.c.bf16 %v414, %v414
    %420 = vst [vmem:[#allocation10] sm:$0xf] %v419
    // Predicated region
    $region46: #{tpu_custom_call.1} parent=1 // pred_check
      _
    $region47: #{tpu_custom_call.1} parent=1 // pred_check_branch
      %422 = sbr.rel (0) target = $region49
    $region48: #{tpu_custom_call.1} parent=1 // pred_region
      %s424 = ssub.s32 64, 64
      %425 = vsyncadd [#allocation4], %s424
      %s427 = sshll.u32 [#allocation10], 4
      %s428 = int_to_ptr.vmem [resolvable:$true] %s427
      %430 = dma.vmem_to_hbm [thread:$0]  %s428, 64, %s7, [#allocation4]
    $region49: #{tpu_custom_call.1} parent=1 // pred_fallthru
      _
    // Predicated region
    $region50: #{tpu_custom_call.1} parent=1 // pred_check
      _
    $region51: #{tpu_custom_call.1} parent=1 // pred_check_branch
      %432 = sbr.rel (0) target = $region53
    $region52: #{tpu_custom_call.1} parent=1 // pred_region
      %433 = dma.done [#allocation4], 64
    $region53: #{tpu_custom_call.1} parent=1 // pred_fallthru
      _
    %434 = vsyncpa [#allocation3], 1
    %435 = vsyncpa [#allocation6], 1
    %436 = vsyncpa [#allocation9], 1
    %437 = vsyncpa [#allocation4], 1

// kernel: tpu_custom_call.1
$region0: #{tpu_custom_call.1}
  #allocation0 [shape = 'u32[]', space=smem, size = 0x4, offset = 0x4, fixed_abs, tag = 'smem constant byte address 0x4 - core index']
  #allocation1 [shape = 'u32[144,128]{1,0:T(1,128)}', space=vmem, size = 0x12000, scoped, tag = 'internal scratch']
  #allocation2 [shape = 'f32[8,128]{1,0:T(8,128)}', space=vmem, size = 0x1000, scoped, tag = 'scratch operand']
  %s0 = inlined_call_operand.hbm [shape: bf16[8,128], index: 0, kind: input, shape index: {}]
  %s1 = inlined_call_operand.hbm [shape: bf16[128,128], index: 1, kind: input, shape index: {}]
  %s2 = inlined_call_operand.vmem [shape: f32[1,128], index: 2, kind: input, shape index: {}]
  %s3 = inlined_call_operand.hbm [shape: bf16[8,128], index: 3, kind: output, shape index: {}]
  %s4 = sld [smem:[#allocation0]]
  $region38: #{tpu_custom_call.1} parent=0
    _
  %s6 = ssub.s32 1, %s4
  %s7 = scalar_select 0, %s6, %s4
  $region1: #{tpu_custom_call.1} parent=0
    #allocation3 [shape = 'u8[2048]{0}', space=vmem, size = 0x800, scoped, tag = 'input window, operand 0, single buffered']
    #allocation4 [shape = 's32[1]{0}', space=sflag, size = 0x4, scoped, tag = 'scoped memory for tpu_custom_call.1']
    #allocation5 [shape = 's32[1]{0}', space=sflag, size = 0x4, scoped, tag = 'scoped memory for tpu_custom_call.1']
    #allocation6 [shape = 'u8[32768]{0}', space=vmem, size = 0x8000, scoped, tag = 'input window, operand 1, single buffered']
    #allocation7 [shape = 's32[1]{0}', space=sflag, size = 0x4, scoped, tag = 'scoped memory for tpu_custom_call.1']
    #allocation8 [shape = 'u8[2048]{0}', space=vmem, size = 0x800, scoped, tag = 'output window, operand 0, single buffered']
    %8 = vsyncpa [#allocation4], 0
    %9 = vsyncpa [#allocation7], 0
    %10 = vsyncpa [#allocation5], 0
    // Predicated region
    $region2: #{tpu_custom_call.1} parent=1 // pred_check
      _
    $region3: #{tpu_custom_call.1} parent=1 // pred_check_branch
      %12 = sbr.rel (0) target = $region5
    $region4: #{tpu_custom_call.1} parent=1 // pred_region
      %s14 = ssub.s32 64, 64
      %15 = vsyncadd [#allocation4], %s14
      %s17 = sshll.u32 [#allocation3], 4
      %s18 = int_to_ptr.vmem [resolvable:$true] %s17
      %20 = dma.hbm_to_vmem [thread:$0]  %s0, 64, %s18, [#allocation4]
    $region5: #{tpu_custom_call.1} parent=1 // pred_fallthru
      _
    // Predicated region
    $region6: #{tpu_custom_call.1} parent=1 // pred_check
      _
    $region7: #{tpu_custom_call.1} parent=1 // pred_check_branch
      %22 = sbr.rel (0) target = $region9
    $region8: #{tpu_custom_call.1} parent=1 // pred_region
      %s24 = ssub.s32 1024, 1024
      %25 = vsyncadd [#allocation7], %s24
      %s26 = sshll.u32 [#allocation6], 4
      %s27 = int_to_ptr.vmem [resolvable:$true] %s26
      %32 = dma.hbm_to_vmem [thread:$0]  %s1, 1024, %s27, [#allocation7], 64, 64, 4
    $region9: #{tpu_custom_call.1} parent=1 // pred_fallthru
      _
    // Predicated region
    $region10: #{tpu_custom_call.1} parent=1 // pred_check
      _
    $region11: #{tpu_custom_call.1} parent=1 // pred_check_branch
      %34 = sbr.rel (0) target = $region13
    $region12: #{tpu_custom_call.1} parent=1 // pred_region
      _
    $region13: #{tpu_custom_call.1} parent=1 // pred_fallthru
      _
    // Predicated region
    $region14: #{tpu_custom_call.1} parent=1 // pred_check
      _
    $region15: #{tpu_custom_call.1} parent=1 // pred_check_branch
      %36 = sbr.rel (0) target = $region17
    $region16: #{tpu_custom_call.1} parent=1 // pred_region
      %37 = dma.done [#allocation4], 64
    $region17: #{tpu_custom_call.1} parent=1 // pred_fallthru
      _
    // Predicated region
    $region18: #{tpu_custom_call.1} parent=1 // pred_check
      _
    $region19: #{tpu_custom_call.1} parent=1 // pred_check_branch
      %39 = sbr.rel (0) target = $region21
    $region20: #{tpu_custom_call.1} parent=1 // pred_region
      %40 = dma.done [#allocation7], 1024
    $region21: #{tpu_custom_call.1} parent=1 // pred_fallthru
      _
    %p42 = scmp.eq.s32.totalorder 0, 0
    // Predicated region
    $region22: #{tpu_custom_call.1} parent=1 // pred_check
      %p43 = pneg %p42
    $region23: #{tpu_custom_call.1} parent=1 // pred_check_branch
      %45 = sbr.rel (%p43) target = $region25
    $region24: #{tpu_custom_call.1} parent=1 // pred_region
      %46 = vst [vmem:[#allocation2] sm:$0xff] 0.0
    $region25: #{tpu_custom_call.1} parent=1 // pred_fallthru
      _
    %v47 = vld [vmem:[#allocation2] sm:$0xff]
    %v48 = vld [vmem:[#allocation3] sm:$0xf]
    %v49 = vld [vmem:[#allocation6] sm:$0xf]
    %v50 = vld [vmem:[#allocation6 + $0x4] sm:$0xf]
    %v51 = vld [vmem:[#allocation6 + $0x8] sm:$0xf]
    %v52 = vld [vmem:[#allocation6 + $0xc] sm:$0xf]
    %v53 = vld [vmem:[#allocation6 + $0x10] sm:$0xf]
    %v54 = vld [vmem:[#allocation6 + $0x14] sm:$0xf]
    %v55 = vld [vmem:[#allocation6 + $0x18] sm:$0xf]
    %v56 = vld [vmem:[#allocation6 + $0x1c] sm:$0xf]
    %v57 = vld [vmem:[#allocation6 + $0x20] sm:$0xf]
    %v58 = vld [vmem:[#allocation6 + $0x24] sm:$0xf]
    %v59 = vld [vmem:[#allocation6 + $0x28] sm:$0xf]
    %v60 = vld [vmem:[#allocation6 + $0x2c] sm:$0xf]
    %v61 = vld [vmem:[#allocation6 + $0x30] sm:$0xf]
    %v62 = vld [vmem:[#allocation6 + $0x34] sm:$0xf]
    %v63 = vld [vmem:[#allocation6 + $0x38] sm:$0xf]
    %v64 = vld [vmem:[#allocation6 + $0x3c] sm:$0xf]
    %v81 = vunpack.c.l.b16 %v49
    %v82 = vunpack.c.l.b16 %v50
    %v83 = vunpack.c.l.b16 %v51
    %v84 = vunpack.c.l.b16 %v52
    %v85 = vunpack.c.l.b16 %v53
    %v86 = vunpack.c.l.b16 %v54
    %v87 = vunpack.c.l.b16 %v55
    %v88 = vunpack.c.l.b16 %v56
    %v89 = vunpack.c.l.b16 %v57
    %v90 = vunpack.c.l.b16 %v58
    %v91 = vunpack.c.l.b16 %v59
    %v92 = vunpack.c.l.b16 %v60
    %v93 = vunpack.c.l.b16 %v61
    %v94 = vunpack.c.l.b16 %v62
    %v95 = vunpack.c.l.b16 %v63
    %v96 = vunpack.c.l.b16 %v64
    %v97 = vpack.c.b16 %v82, %v81
    %v98 = vpack.c.b16 %v84, %v83
    %v99 = vpack.c.b16 %v86, %v85
    %v100 = vpack.c.b16 %v88, %v87
    %v101 = vpack.c.b16 %v90, %v89
    %v102 = vpack.c.b16 %v92, %v91
    %v103 = vpack.c.b16 %v94, %v93
    %v104 = vpack.c.b16 %v96, %v95
    %113 = vmatprep.subr.bf16.mxu0 0
    %114 = vmatpush1.bf16.msra.mxu0 %v97
    %115 = vmatprep.subr.bf16.mxu0 0
    %116 = vmatpush1.bf16.msra.mxu0 %v98
    %117 = vmatprep.subr.bf16.mxu0 0
    %118 = vmatpush1.bf16.msra.mxu0 %v99
    %119 = vmatprep.subr.bf16.mxu0 0
    %120 = vmatpush1.bf16.msra.mxu0 %v100
    %121 = vmatprep.subr.bf16.mxu0 0
    %122 = vmatpush1.bf16.msra.mxu0 %v101
    %123 = vmatprep.subr.bf16.mxu0 0
    %124 = vmatpush1.bf16.msra.mxu0 %v102
    %125 = vmatprep.subr.bf16.mxu0 0
    %126 = vmatpush1.bf16.msra.mxu0 %v103
    %127 = vmatprep.subr.bf16.mxu0 0
    %128 = vmatpush1.bf16.msra.mxu0 %v104
    %129 = vmatprep.subr.bf16.mxu0 0
    %130 = vmatpush1.bf16.msra.mxu0 0
    %131 = vmatprep.subr.bf16.mxu0 0
    %132 = vmatpush1.bf16.msra.mxu0 0
    %133 = vmatprep.subr.bf16.mxu0 0
    %134 = vmatpush1.bf16.msra.mxu0 0
    %135 = vmatprep.subr.bf16.mxu0 0
    %136 = vmatpush1.bf16.msra.mxu0 0
    %137 = vmatprep.subr.bf16.mxu0 0
    %138 = vmatpush1.bf16.msra.mxu0 0
    %139 = vmatprep.subr.bf16.mxu0 0
    %140 = vmatpush1.bf16.msra.mxu0 0
    %141 = vmatprep.subr.bf16.mxu0 0
    %142 = vmatpush1.bf16.msra.mxu0 0
    %143 = vmatprep.subr.bf16.mxu0 0
    %144 = vmatpush1.bf16.msra.mxu0 0
    %145 = vmatprep.mubr.bf16.mxu0 0
    %146 = vmatmul.mubr.bf16.gmra.mrb[0].mxu0 %v48
    %v147 = vpop.f32.mrb[0].mxu0
    %v148 = vadd.f32 0.0, %v147
    %v149 = vpop.f32.mrb[0].mxu0
    %v150 = vpop.f32.mrb[0].mxu0
    %v151 = vpop.f32.mrb[0].mxu0
    %152 = vdwg.mxu0
    %v153 = vadd.f32 %v47, %v148
    %154 = vst [vmem:[#allocation2] sm:$0xff] %v153
    // Predicated region
    $region26: #{tpu_custom_call.1} parent=1 // pred_check
      %p155 = pneg %p42
    $region27: #{tpu_custom_call.1} parent=1 // pred_check_branch
      %157 = sbr.rel (%p155) target = $region29
    $region28: #{tpu_custom_call.1} parent=1 // pred_region
      %v158 = vld [vmem:[#allocation2] sm:$0xff]
      %v159 = vld [vmem:[%s2] sm:$0x1]
      %v161 = vlaneseq
      %v162 = vshrl.u32 %v161, 7
      %v163 = vsub.s32 0, %v162
      %v164 = vrot.slane %v159, %v163
      %v166 = vadd.f32 %v158, %v164
      %v167 = vmax.f32 %v166, 0.0
      %v168 = vpack.c.bf16 %v167, %v167
      %169 = vst [vmem:[#allocation8] sm:$0xf] %v168
    $region29: #{tpu_custom_call.1} parent=1 // pred_fallthru
      _
    // Predicated region
    $region30: #{tpu_custom_call.1} parent=1 // pred_check
      _
    $region31: #{tpu_custom_call.1} parent=1 // pred_check_branch
      %171 = sbr.rel (0) target = $region33
    $region32: #{tpu_custom_call.1} parent=1 // pred_region
      %s173 = ssub.s32 64, 64
      %174 = vsyncadd [#allocation5], %s173
      %s176 = sshll.u32 [#allocation8], 4
      %s177 = int_to_ptr.vmem [resolvable:$true] %s176
      %179 = dma.vmem_to_hbm [thread:$0]  %s177, 64, %s3, [#allocation5]
    $region33: #{tpu_custom_call.1} parent=1 // pred_fallthru
      _
    // Predicated region
    $region34: #{tpu_custom_call.1} parent=1 // pred_check
      _
    $region35: #{tpu_custom_call.1} parent=1 // pred_check_branch
      %181 = sbr.rel (0) target = $region37
    $region36: #{tpu_custom_call.1} parent=1 // pred_region
      %182 = dma.done [#allocation5], 64
    $region37: #{tpu_custom_call.1} parent=1 // pred_fallthru
      _
    %183 = vsyncpa [#allocation4], 1
    %184 = vsyncpa [#allocation7], 1
    %185 = vsyncpa [#allocation5], 1

</llo_original>
